<compile_context>
chip_gen: v5e
topology: v5e:2x2
jax: 0.10.0
libtpu: 0.0.40
codegen_flags: <defaults>
</compile_context>

<pallas_src>
import jax
import jax.numpy as jnp
from jax.experimental import pallas as pl
from jax.experimental.pallas import tpu as pltpu


def make_var_encoder_kernel(num_hidden_layers):
    """Build a kernel for: x -> [Linear+ReLU]*num_hidden -> (mu head, sigma head)."""

    def kernel(*refs):
        # refs layout:
        #   [inv_temp(SMEM 1x1), x,
        #    (w_h, b_h) * num_hidden_layers,
        #    w_mu, b_mu, w_sigma, b_sigma,
        #    mu_out, sigma_out]
        inv_t_ref = refs[0]
        x_ref = refs[1]
        idx = 2

        h = x_ref[...]  # (TB, dim_input) f32
        for _ in range(num_hidden_layers):
            w_ref, b_ref = refs[idx], refs[idx + 1]
            idx += 2
            h = jnp.dot(h, w_ref[...], preferred_element_type=jnp.float32) + b_ref[...]
            h = jnp.maximum(h, 0.0)  # ReLU

        wmu_ref, bmu_ref = refs[idx], refs[idx + 1]
        wsg_ref, bsg_ref = refs[idx + 2], refs[idx + 3]
        mu_ref, sigma_ref = refs[idx + 4], refs[idx + 5]

        inv_t = inv_t_ref[0, 0]

        # mu = sigmoid(logits / T)  (stable: exp overflow -> inf -> result 0, correct)
        mu_logits = (
            jnp.dot(h, wmu_ref[...], preferred_element_type=jnp.float32) + bmu_ref[...]
        ) * inv_t
        mu_ref[...] = 1.0 / (1.0 + jnp.exp(-mu_logits))

        # sigma = softplus(logits) = max(x, 0) + log(1 + exp(-|x|))   (stable form)
        sg = jnp.dot(h, wsg_ref[...], preferred_element_type=jnp.float32) + bsg_ref[...]
        sigma_ref[...] = jnp.maximum(sg, 0.0) + jnp.log(1.0 + jnp.exp(-jnp.abs(sg)))

    return kernel


def var_encoder_forward(x, hidden_params, w_out, b_out, temperature, dim_output,
                        block_b=128):
    """x:(B,Din) f32; hidden_params: list of (W:(d_in,d_out), b:(1,d_out));
    w_out:(d_h, 2*dim_output); b_out:(1, 2*dim_output); temperature: python float.
    Returns (mu, sigma), each (B, dim_output) f32."""
    B, dim_input = x.shape
    if B % block_b != 0:
        # Fall back to a single full-batch tile (full-array block is always legal).
        block_b = B
    grid = (B // block_b,)

    # Split output head host-side -> each branch writes a lane-dense tile.
    w_mu, w_sg = w_out[:, :dim_output], w_out[:, dim_output:]
    b_mu, b_sg = b_out[:, :dim_output], b_out[:, dim_output:]
    inv_t = jnp.full((1, 1), 1.0 / float(temperature), dtype=jnp.float32)

    const = lambda i: (0, 0)          # weights / biases / scalar: resident block
    batch_map = lambda i: (i, 0)      # batch-tiled arrays

    in_specs = [
        pl.BlockSpec((1, 1), const, memory_space=pltpu.MemorySpace.SMEM),  # 1/T
        pl.BlockSpec((block_b, dim_input), batch_map),                     # x
    ]
    args = [inv_t, x]
    for (w, b) in hidden_params:
        in_specs.append(pl.BlockSpec(w.shape, const))
        in_specs.append(pl.BlockSpec(b.shape, const))
        args += [w, b]
    for (w, b) in ((w_mu, b_mu), (w_sg, b_sg)):
        in_specs.append(pl.BlockSpec(w.shape, const))
        in_specs.append(pl.BlockSpec(b.shape, const))
        args += [w, b]

    out_shape = (
        jax.ShapeDtypeStruct((B, dim_output), jnp.float32),
        jax.ShapeDtypeStruct((B, dim_output), jnp.float32),
    )
    out_specs = (
        pl.BlockSpec((block_b, dim_output), batch_map),
        pl.BlockSpec((block_b, dim_output), batch_map),
    )

    mu, sigma = pl.pallas_call(
        make_var_encoder_kernel(len(hidden_params)),
        grid=grid,
        in_specs=in_specs,
        out_specs=out_specs,
        out_shape=out_shape,
        compiler_params=pltpu.CompilerParams(
            dimension_semantics=("parallel",),  # batch tiles -> both TCs on v7x
        ),
    )(*args)
    return mu, sigma


def var_encoder_reference(x, hidden_params, w_out, b_out, temperature, dim_output):
    h = x
    for (w, b) in hidden_params:
        h = jax.nn.relu(h @ w + b)
    g = h @ w_out + b_out
    mu = jax.nn.sigmoid(g[:, :dim_output] / temperature)
    sigma = jax.nn.softplus(g[:, dim_output:])
    return mu, sigma


if __name__ == "__main__":
    # Shapes: M-dim (batch) batched to >=128 per review; vocab-free module so all
    # feature dims are lane-aligned (multiples of 128) and everything fits VMEM.
    B, dim_input, dim_hidden, dim_output, num_layers = 256, 128, 256, 128, 2
    temperature = 0.7

    key = jax.random.PRNGKey(0)
    keys = jax.random.split(key, 2 * (num_layers + 1) + 1)

    x = jax.random.normal(keys[0], (B, dim_input), dtype=jnp.float32)

    # Deterministic "PyTorch Linear-style" init: U(-1/sqrt(fan_in), 1/sqrt(fan_in)).
    hidden_params = []
    d_in = dim_input
    ki = 1
    for _ in range(num_layers):
        bound = 1.0 / (d_in ** 0.5)
        w = jax.random.uniform(keys[ki], (d_in, dim_hidden), jnp.float32, -bound, bound)
        ki += 1
        b = jax.random.uniform(keys[ki], (1, dim_hidden), jnp.float32, -bound, bound)
        ki += 1
        hidden_params.append((w, b))
        d_in = dim_hidden

    bound = 1.0 / (d_in ** 0.5)
    w_out = jax.random.uniform(keys[ki], (d_in, 2 * dim_output), jnp.float32, -bound, bound)
    ki += 1
    b_out = jax.random.uniform(keys[ki], (1, 2 * dim_output), jnp.float32, -bound, bound)

    mu, sigma = var_encoder_forward(
        x, hidden_params, w_out, b_out, temperature, dim_output
    )
    jax.block_until_ready(mu)
    jax.block_until_ready(sigma)

    mu_ref, sigma_ref = var_encoder_reference(
        x, hidden_params, w_out, b_out, temperature, dim_output
    )
    assert jnp.allclose(mu, mu_ref, rtol=1e-4, atol=1e-4), "mu mismatch"
    assert jnp.allclose(sigma, sigma_ref, rtol=1e-4, atol=1e-4), "sigma mismatch"

    print("KERNEL_OK")
</pallas_src>

<mosaic_0001>
module attributes {stable_mosaic.version = 11 : i64} {
  func.func @kernel(%arg0: i32, %arg1: memref<1x1xf32, #tpu.memory_space<smem>>, %arg2: memref<128x128xf32, #tpu.memory_space<vmem>>, %arg3: memref<128x256xf32, #tpu.memory_space<vmem>>, %arg4: memref<1x256xf32, #tpu.memory_space<vmem>>, %arg5: memref<256x256xf32, #tpu.memory_space<vmem>>, %arg6: memref<1x256xf32, #tpu.memory_space<vmem>>, %arg7: memref<256x128xf32, #tpu.memory_space<vmem>>, %arg8: memref<1x128xf32, #tpu.memory_space<vmem>>, %arg9: memref<256x128xf32, #tpu.memory_space<vmem>>, %arg10: memref<1x128xf32, #tpu.memory_space<vmem>>, %arg11: memref<128x128xf32, #tpu.memory_space<vmem>>, %arg12: memref<128x128xf32, #tpu.memory_space<vmem>>) attributes {dimension_semantics = [#tpu.dimension_semantics<parallel>], iteration_bounds = array<i64: 2>, scalar_prefetch = 0 : i64, scratch_operands = 0 : i64, tpu.core_type = #tpu.core_type<tc>, window_params = [{transform_indices = @transform_0, window_bounds = array<i64: 1, 1>}, {transform_indices = @transform_1, window_bounds = array<i64: 128, 128>}, {pipeline_mode = #tpu.pipeline_mode<synchronous>, transform_indices = @transform_2, window_bounds = array<i64: 128, 256>}, {pipeline_mode = #tpu.pipeline_mode<synchronous>, transform_indices = @transform_3, window_bounds = array<i64: 1, 256>}, {pipeline_mode = #tpu.pipeline_mode<synchronous>, transform_indices = @transform_4, window_bounds = array<i64: 256, 256>}, {pipeline_mode = #tpu.pipeline_mode<synchronous>, transform_indices = @transform_5, window_bounds = array<i64: 1, 256>}, {pipeline_mode = #tpu.pipeline_mode<synchronous>, transform_indices = @transform_6, window_bounds = array<i64: 256, 128>}, {pipeline_mode = #tpu.pipeline_mode<synchronous>, transform_indices = @transform_7, window_bounds = array<i64: 1, 128>}, {pipeline_mode = #tpu.pipeline_mode<synchronous>, transform_indices = @transform_8, window_bounds = array<i64: 256, 128>}, {pipeline_mode = #tpu.pipeline_mode<synchronous>, transform_indices = @transform_9, window_bounds = array<i64: 1, 128>}, {transform_indices = @transform_10, window_bounds = array<i64: 128, 128>}, {transform_indices = @transform_11, window_bounds = array<i64: 128, 128>}]} {
    %c0 = arith.constant 0 : index
    %c0_0 = arith.constant 0 : index
    %0 = vector.load %arg2[%c0, %c0_0] : memref<128x128xf32, #tpu.memory_space<vmem>>, vector<128x128xf32>
    %c0_1 = arith.constant 0 : index
    %c0_2 = arith.constant 0 : index
    %1 = vector.load %arg3[%c0_1, %c0_2] : memref<128x256xf32, #tpu.memory_space<vmem>>, vector<128x256xf32>
    %cst = arith.constant dense<0.000000e+00> : vector<128x256xf32>
    %2 = tpu.matmul %0, %1, %cst {dimension_numbers = #tpu.dot_dimension_numbers<[1], [0], [0], [1], [0, 0, 1, 1], [], []>} : vector<128x128xf32>, vector<128x256xf32>, vector<128x256xf32> -> vector<128x256xf32>
    %c0_3 = arith.constant 0 : index
    %c0_4 = arith.constant 0 : index
    %3 = vector.load %arg4[%c0_3, %c0_4] : memref<1x256xf32, #tpu.memory_space<vmem>>, vector<1x256xf32>
    %4 = vector.broadcast %3 : vector<1x256xf32> to vector<128x256xf32>
    %5 = arith.addf %2, %4 : vector<128x256xf32>
    %cst_5 = arith.constant 0.000000e+00 : f32
    %6 = vector.broadcast %cst_5 : f32 to vector<128x256xf32>
    %7 = arith.maximumf %5, %6 : vector<128x256xf32>
    %c0_6 = arith.constant 0 : index
    %c0_7 = arith.constant 0 : index
    %8 = vector.load %arg5[%c0_6, %c0_7] : memref<256x256xf32, #tpu.memory_space<vmem>>, vector<256x256xf32>
    %cst_8 = arith.constant dense<0.000000e+00> : vector<128x256xf32>
    %9 = tpu.matmul %7, %8, %cst_8 {dimension_numbers = #tpu.dot_dimension_numbers<[1], [0], [0], [1], [0, 0, 1, 1], [], []>} : vector<128x256xf32>, vector<256x256xf32>, vector<128x256xf32> -> vector<128x256xf32>
    %c0_9 = arith.constant 0 : index
    %c0_10 = arith.constant 0 : index
    %10 = vector.load %arg6[%c0_9, %c0_10] : memref<1x256xf32, #tpu.memory_space<vmem>>, vector<1x256xf32>
    %11 = vector.broadcast %10 : vector<1x256xf32> to vector<128x256xf32>
    %12 = arith.addf %9, %11 : vector<128x256xf32>
    %cst_11 = arith.constant 0.000000e+00 : f32
    %13 = vector.broadcast %cst_11 : f32 to vector<128x256xf32>
    %14 = arith.maximumf %12, %13 : vector<128x256xf32>
    %c0_12 = arith.constant 0 : index
    %c0_13 = arith.constant 0 : index
    %15 = memref.load %arg1[%c0_12, %c0_13] : memref<1x1xf32, #tpu.memory_space<smem>>
    %c0_14 = arith.constant 0 : index
    %c0_15 = arith.constant 0 : index
    %16 = vector.load %arg7[%c0_14, %c0_15] : memref<256x128xf32, #tpu.memory_space<vmem>>, vector<256x128xf32>
    %cst_16 = arith.constant dense<0.000000e+00> : vector<128x128xf32>
    %17 = tpu.matmul %14, %16, %cst_16 {dimension_numbers = #tpu.dot_dimension_numbers<[1], [0], [0], [1], [0, 0, 1, 1], [], []>} : vector<128x256xf32>, vector<256x128xf32>, vector<128x128xf32> -> vector<128x128xf32>
    %c0_17 = arith.constant 0 : index
    %c0_18 = arith.constant 0 : index
    %18 = vector.load %arg8[%c0_17, %c0_18] : memref<1x128xf32, #tpu.memory_space<vmem>>, vector<1x128xf32>
    %19 = vector.broadcast %18 : vector<1x128xf32> to vector<128x128xf32>
    %20 = arith.addf %17, %19 : vector<128x128xf32>
    %21 = vector.broadcast %15 : f32 to vector<128x128xf32>
    %22 = arith.mulf %20, %21 : vector<128x128xf32>
    %cst_19 = arith.constant 0.000000e+00 : f32
    %23 = vector.broadcast %cst_19 : f32 to vector<128x128xf32>
    %24 = arith.subf %23, %22 : vector<128x128xf32>
    %25 = math.exp %24 : vector<128x128xf32>
    %cst_20 = arith.constant 1.000000e+00 : f32
    %26 = vector.broadcast %cst_20 : f32 to vector<128x128xf32>
    %27 = arith.addf %26, %25 : vector<128x128xf32>
    %cst_21 = arith.constant 1.000000e+00 : f32
    %28 = vector.broadcast %cst_21 : f32 to vector<128x128xf32>
    %29 = arith.divf %28, %27 : vector<128x128xf32>
    %c0_22 = arith.constant 0 : index
    %c0_23 = arith.constant 0 : index
    %30 = vector.load %arg11[%c0_22, %c0_23] : memref<128x128xf32, #tpu.memory_space<vmem>>, vector<128x128xf32>
    tpu.vector_store %arg11[%c0_22, %c0_23], %29 {strides = array<i32>} : memref<128x128xf32, #tpu.memory_space<vmem>>, vector<128x128xf32>,
    %c0_24 = arith.constant 0 : index
    %c0_25 = arith.constant 0 : index
    %31 = vector.load %arg9[%c0_24, %c0_25] : memref<256x128xf32, #tpu.memory_space<vmem>>, vector<256x128xf32>
    %cst_26 = arith.constant dense<0.000000e+00> : vector<128x128xf32>
    %32 = tpu.matmul %14, %31, %cst_26 {dimension_numbers = #tpu.dot_dimension_numbers<[1], [0], [0], [1], [0, 0, 1, 1], [], []>} : vector<128x256xf32>, vector<256x128xf32>, vector<128x128xf32> -> vector<128x128xf32>
    %c0_27 = arith.constant 0 : index
    %c0_28 = arith.constant 0 : index
    %33 = vector.load %arg10[%c0_27, %c0_28] : memref<1x128xf32, #tpu.memory_space<vmem>>, vector<1x128xf32>
    %34 = vector.broadcast %33 : vector<1x128xf32> to vector<128x128xf32>
    %35 = arith.addf %32, %34 : vector<128x128xf32>
    %cst_29 = arith.constant 0.000000e+00 : f32
    %36 = vector.broadcast %cst_29 : f32 to vector<128x128xf32>
    %37 = arith.maximumf %35, %36 : vector<128x128xf32>
    %38 = math.absf %35 : vector<128x128xf32>
    %cst_30 = arith.constant 0.000000e+00 : f32
    %39 = vector.broadcast %cst_30 : f32 to vector<128x128xf32>
    %40 = arith.subf %39, %38 : vector<128x128xf32>
    %41 = math.exp %40 : vector<128x128xf32>
    %cst_31 = arith.constant 1.000000e+00 : f32
    %42 = vector.broadcast %cst_31 : f32 to vector<128x128xf32>
    %43 = arith.addf %42, %41 : vector<128x128xf32>
    %44 = math.log %43 : vector<128x128xf32>
    %45 = arith.addf %37, %44 : vector<128x128xf32>
    %c0_32 = arith.constant 0 : index
    %c0_33 = arith.constant 0 : index
    %46 = vector.load %arg12[%c0_32, %c0_33] : memref<128x128xf32, #tpu.memory_space<vmem>>, vector<128x128xf32>
    tpu.vector_store %arg12[%c0_32, %c0_33], %45 {strides = array<i32>} : memref<128x128xf32, #tpu.memory_space<vmem>>, vector<128x128xf32>,
    return
  }
  func.func @transform_0(%arg0: i32) -> (i32, i32) {
    %c0_i32 = arith.constant 0 : i32
    %c0_i32_0 = arith.constant 0 : i32
    %c0_i32_1 = arith.constant 0 : i32
    return %c0_i32, %c0_i32_0 : i32, i32
  }
  func.func @transform_1(%arg0: i32) -> (i32, i32) {
    %c0_i32 = arith.constant 0 : i32
    %c0_i32_0 = arith.constant 0 : i32
    return %arg0, %c0_i32 : i32, i32
  }
  func.func @transform_2(%arg0: i32) -> (i32, i32) {
    %c0_i32 = arith.constant 0 : i32
    %c0_i32_0 = arith.constant 0 : i32
    %c0_i32_1 = arith.constant 0 : i32
    return %c0_i32, %c0_i32_0 : i32, i32
  }
  func.func @transform_3(%arg0: i32) -> (i32, i32) {
    %c0_i32 = arith.constant 0 : i32
    %c0_i32_0 = arith.constant 0 : i32
    %c0_i32_1 = arith.constant 0 : i32
    return %c0_i32, %c0_i32_0 : i32, i32
  }
  func.func @transform_4(%arg0: i32) -> (i32, i32) {
    %c0_i32 = arith.constant 0 : i32
    %c0_i32_0 = arith.constant 0 : i32
    %c0_i32_1 = arith.constant 0 : i32
    return %c0_i32, %c0_i32_0 : i32, i32
  }
  func.func @transform_5(%arg0: i32) -> (i32, i32) {
    %c0_i32 = arith.constant 0 : i32
    %c0_i32_0 = arith.constant 0 : i32
    %c0_i32_1 = arith.constant 0 : i32
    return %c0_i32, %c0_i32_0 : i32, i32
  }
  func.func @transform_6(%arg0: i32) -> (i32, i32) {
    %c0_i32 = arith.constant 0 : i32
    %c0_i32_0 = arith.constant 0 : i32
    %c0_i32_1 = arith.constant 0 : i32
    return %c0_i32, %c0_i32_0 : i32, i32
  }
  func.func @transform_7(%arg0: i32) -> (i32, i32) {
    %c0_i32 = arith.constant 0 : i32
    %c0_i32_0 = arith.constant 0 : i32
    %c0_i32_1 = arith.constant 0 : i32
    return %c0_i32, %c0_i32_0 : i32, i32
  }
  func.func @transform_8(%arg0: i32) -> (i32, i32) {
    %c0_i32 = arith.constant 0 : i32
    %c0_i32_0 = arith.constant 0 : i32
    %c0_i32_1 = arith.constant 0 : i32
    return %c0_i32, %c0_i32_0 : i32, i32
  }
  func.func @transform_9(%arg0: i32) -> (i32, i32) {
    %c0_i32 = arith.constant 0 : i32
    %c0_i32_0 = arith.constant 0 : i32
    %c0_i32_1 = arith.constant 0 : i32
    return %c0_i32, %c0_i32_0 : i32, i32
  }
  func.func @transform_10(%arg0: i32) -> (i32, i32) {
    %c0_i32 = arith.constant 0 : i32
    %c0_i32_0 = arith.constant 0 : i32
    return %arg0, %c0_i32 : i32, i32
  }
  func.func @transform_11(%arg0: i32) -> (i32, i32) {
    %c0_i32 = arith.constant 0 : i32
    %c0_i32_0 = arith.constant 0 : i32
    return %arg0, %c0_i32 : i32, i32
  }
}

</mosaic_0001>

<llo_original>
// kernel: tpu_custom_call.1
$region0: #{tpu_custom_call.1}
  #allocation0 [shape = 'u32[]', space=smem, size = 0x4, offset = 0x4, fixed_abs, tag = 'smem constant byte address 0x4 - core index']
  #allocation1 [shape = 'u32[72,128]{1,0:T(1,128)}', space=vmem, size = 0x9000, scoped, tag = 'internal scratch']
  #allocation2 [shape = 'f32[1,1]{1,0:T(1,128)S(6)}', space=smem, size = 0x200, scoped, tag = 'scoped memory for tpu_custom_call.1']
  %s0 = inlined_call_operand.<no memory space> [shape: f32[1,1], index: 0, kind: input, shape index: {}]
  %s1 = inlined_call_operand.hbm [shape: f32[256,128], index: 1, kind: input, shape index: {}]
  %s2 = inlined_call_operand.hbm [shape: f32[128,256], index: 2, kind: input, shape index: {}]
  %s3 = inlined_call_operand.vmem [shape: f32[1,256], index: 3, kind: input, shape index: {}]
  %s4 = inlined_call_operand.hbm [shape: f32[256,256], index: 4, kind: input, shape index: {}]
  %s5 = inlined_call_operand.vmem [shape: f32[1,256], index: 5, kind: input, shape index: {}]
  %s6 = inlined_call_operand.hbm [shape: f32[256,128], index: 6, kind: input, shape index: {}]
  %s7 = inlined_call_operand.vmem [shape: f32[1,128], index: 7, kind: input, shape index: {}]
  %s8 = inlined_call_operand.hbm [shape: f32[256,128], index: 8, kind: input, shape index: {}]
  %s9 = inlined_call_operand.vmem [shape: f32[1,128], index: 9, kind: input, shape index: {}]
  %s10 = inlined_call_operand.hbm [shape: f32[256,128], index: 10, kind: output, shape index: {0}]
  %s11 = inlined_call_operand.hbm [shape: f32[256,128], index: 11, kind: output, shape index: {1}]
  %12 = xla_tuple %s10, %s11
  %s13 = sld [smem:[#allocation0]]
  $region101: #{tpu_custom_call.1} parent=0
    _
  %s15 = ssub.s32 1, %s13
  %s16 = scalar_select 0, %s15, %s13
  %17 = sst [smem:[#allocation2]] %s0
  $region1: #{tpu_custom_call.1} parent=0
    #allocation3 [shape = 'u8[131072]{0}', space=vmem, size = 0x20000, scoped, tag = 'input window, operand 1']
    #allocation4 [shape = 's32[2]{0}', space=sflag, size = 0x8, scoped, tag = 'scoped memory for tpu_custom_call.1']
    #allocation5 [shape = 's32[2]{0}', space=sflag, size = 0x8, scoped, tag = 'scoped memory for tpu_custom_call.1']
    #allocation6 [shape = 'u8[131072]{0}', space=vmem, size = 0x20000, scoped, tag = 'input window, operand 2, single buffered']
    #allocation7 [shape = 's32[1]{0}', space=sflag, size = 0x4, scoped, tag = 'scoped memory for tpu_custom_call.1']
    #allocation8 [shape = 'u8[262144]{0}', space=vmem, size = 0x40000, scoped, tag = 'input window, operand 4, single buffered']
    #allocation9 [shape = 'u8[131072]{0}', space=vmem, size = 0x20000, scoped, tag = 'input window, operand 6, single buffered']
    #allocation10 [shape = 's32[1]{0}', space=sflag, size = 0x4, scoped, tag = 'scoped memory for tpu_custom_call.1']
    #allocation11 [shape = 'u8[131072]{0}', space=vmem, size = 0x20000, scoped, tag = 'input window, operand 8, single buffered']
    #allocation12 [shape = 'u8[131072]{0}', space=vmem, size = 0x20000, scoped, tag = 'output window, operand 0']
    #allocation13 [shape = 'u8[131072]{0}', space=vmem, size = 0x20000, scoped, tag = 'output window, operand 1']
    #allocation14 [shape = 's32[2]{0}', space=sflag, size = 0x8, scoped, tag = 'scoped memory for tpu_custom_call.1']
    %18 = vsyncpa [#allocation4], 0
    %s19 = scalar_lea.sflag [#allocation4], 1
    %20 = vsyncpa %s19, 0
    %21 = vsyncpa [#allocation7], 0
    %22 = vsyncpa [#allocation10], 0
    %23 = vsyncpa [#allocation5], 0
    %s24 = scalar_lea.sflag [#allocation5], 1
    %25 = vsyncpa %s24, 0
    %26 = vsyncpa [#allocation14], 0
    %s27 = scalar_lea.sflag [#allocation14], 1
    %28 = vsyncpa %s27, 0
    loop: start=0, step=1, limit=4
    $region2: #{tpu_custom_call.1} parent=1 // loop_pre_header
      _
    $region3: #{tpu_custom_call.1} parent=1 // loop_header
      %s30 = sphi 0, %s34
      %p31 = scmp.ge.s32.totalorder %s30, 4
      %s38 = sphi 0, %s38
      %s40 = sphi 0, %s38
      %s41 = sphi 0, %s40
      %s55 = sphi 0, %s41
      %s61 = sphi 0, %s63
      %s64 = sphi 0, %s61
      %s65 = sphi 0, %s64
      %s81 = sphi 0, %s65
      %s85 = sphi 0, %s85
      %s87 = sphi 0, %s85
      %s88 = sphi 0, %s87
      %s102 = sphi 0, %s88
      %s106 = sphi 0, %s106
      %s108 = sphi 0, %s106
      %s109 = sphi 0, %s108
      %s123 = sphi 0, %s109
      %s127 = sphi 0, %s127
      %s129 = sphi 0, %s127
      %s130 = sphi 0, %s129
      %s144 = sphi 0, %s130
      %s148 = sphi 0, %s148
      %s150 = sphi 0, %s148
      %s151 = sphi 0, %s150
      %s165 = sphi 0, %s151
      %s169 = sphi 0, %s169
      %s171 = sphi 0, %s169
      %s172 = sphi 0, %s171
      %s186 = sphi 0, %s172
      %s190 = sphi 0, %s190
      %s192 = sphi 0, %s190
      %s193 = sphi 0, %s192
      %s207 = sphi 0, %s193
      %s211 = sphi 0, %s211
      %s213 = sphi 0, %s211
      %s214 = sphi 0, %s213
      %s228 = sphi 0, %s214
      %s232 = sphi 0, %s232
      %s234 = sphi 0, %s232
      %s235 = sphi 0, %s234
      %s249 = sphi 0, %s235
      %s255 = sphi 0, %s257
      %s258 = sphi 0, %s255
      %s259 = sphi 0, %s258
      %s275 = sphi 0, %s259
      %s281 = sphi 0, %s283
      %s284 = sphi 0, %s281
      %s285 = sphi 0, %s284
      %s301 = sphi 0, %s285
    $region4: #{tpu_custom_call.1} parent=1 // loop_header_branch
      %33 = sbr.rel (%p31) target = $region8
    $region5: #{tpu_custom_call.1} parent=1 // loop_body
      %s35 = ssub.s32 %s30, 1
      %s36 = ssub.s32 %s30, 2
      %s37 = sadd.s32 %s30, 1
      %s39 = sadd.s32 %s38, 1
      %p42 = scmp.eq.s32.totalorder %s30, 1
      %p43 = scmp.ne.s32.totalorder %s38, %s40
      %p44 = scmp.eq.s32.totalorder %s30, 0
      %p45 = por %p43, %p44
      %p46 = scmp.ne.s32.totalorder %s38, %s40
      %p47 = scmp.eq.s32.totalorder %s35, 1
      %p48 = por %p46, %p47
      %p49 = scmp.ne.s32.totalorder %s40, %s41
      %p50 = scmp.eq.s32.totalorder %s35, 0
      %p51 = por %p49, %p50
      %p52 = scmp.ne.s32.totalorder %s40, %s41
      %p53 = scmp.eq.s32.totalorder %s36, 1
      %p54 = por %p52, %p53
      %p56 = scmp.ne.s32.totalorder %s41, %s55
      %p57 = scmp.eq.s32.totalorder %s36, 0
      %p58 = por %p56, %p57
      %s59 = ssub.s32 %s30, %s37
      %p60 = scmp.eq.s32.totalorder %s59, 0
      %s62 = sadd.s32 %s61, 1
      %s63 = scalar_select %p60, %s61, %s62
      %p66 = pneg %p60
      %p67 = scmp.eq.s32.totalorder %s30, 1
      %p68 = por %p66, %p67
      %p69 = scmp.ne.s32.totalorder %s61, %s64
      %p70 = scmp.eq.s32.totalorder %s30, 0
      %p71 = por %p69, %p70
      %p72 = scmp.ne.s32.totalorder %s61, %s64
      %p73 = scmp.eq.s32.totalorder %s35, 1
      %p74 = por %p72, %p73
      %p75 = scmp.ne.s32.totalorder %s64, %s65
      %p76 = scmp.eq.s32.totalorder %s35, 0
      %p77 = por %p75, %p76
      %p78 = scmp.ne.s32.totalorder %s64, %s65
      %p79 = scmp.eq.s32.totalorder %s36, 1
      %p80 = por %p78, %p79
      %p82 = scmp.ne.s32.totalorder %s65, %s81
      %p83 = scmp.eq.s32.totalorder %s36, 0
      %p84 = por %p82, %p83
      %s86 = sadd.s32 %s85, 1
      %p89 = scmp.eq.s32.totalorder %s30, 1
      %p90 = scmp.ne.s32.totalorder %s85, %s87
      %p91 = scmp.eq.s32.totalorder %s30, 0
      %p92 = por %p90, %p91
      %p93 = scmp.ne.s32.totalorder %s85, %s87
      %p94 = scmp.eq.s32.totalorder %s35, 1
      %p95 = por %p93, %p94
      %p96 = scmp.ne.s32.totalorder %s87, %s88
      %p97 = scmp.eq.s32.totalorder %s35, 0
      %p98 = por %p96, %p97
      %p99 = scmp.ne.s32.totalorder %s87, %s88
      %p100 = scmp.eq.s32.totalorder %s36, 1
      %p101 = por %p99, %p100
      %p103 = scmp.ne.s32.totalorder %s88, %s102
      %p104 = scmp.eq.s32.totalorder %s36, 0
      %p105 = por %p103, %p104
      %s107 = sadd.s32 %s106, 1
      %p110 = scmp.eq.s32.totalorder %s30, 1
      %p111 = scmp.ne.s32.totalorder %s106, %s108
      %p112 = scmp.eq.s32.totalorder %s30, 0
      %p113 = por %p111, %p112
      %p114 = scmp.ne.s32.totalorder %s106, %s108
      %p115 = scmp.eq.s32.totalorder %s35, 1
      %p116 = por %p114, %p115
      %p117 = scmp.ne.s32.totalorder %s108, %s109
      %p118 = scmp.eq.s32.totalorder %s35, 0
      %p119 = por %p117, %p118
      %p120 = scmp.ne.s32.totalorder %s108, %s109
      %p121 = scmp.eq.s32.totalorder %s36, 1
      %p122 = por %p120, %p121
      %p124 = scmp.ne.s32.totalorder %s109, %s123
      %p125 = scmp.eq.s32.totalorder %s36, 0
      %p126 = por %p124, %p125
      %s128 = sadd.s32 %s127, 1
      %p131 = scmp.eq.s32.totalorder %s30, 1
      %p132 = scmp.ne.s32.totalorder %s127, %s129
      %p133 = scmp.eq.s32.totalorder %s30, 0
      %p134 = por %p132, %p133
      %p135 = scmp.ne.s32.totalorder %s127, %s129
      %p136 = scmp.eq.s32.totalorder %s35, 1
      %p137 = por %p135, %p136
      %p138 = scmp.ne.s32.totalorder %s129, %s130
      %p139 = scmp.eq.s32.totalorder %s35, 0
      %p140 = por %p138, %p139
      %p141 = scmp.ne.s32.totalorder %s129, %s130
      %p142 = scmp.eq.s32.totalorder %s36, 1
      %p143 = por %p141, %p142
      %p145 = scmp.ne.s32.totalorder %s130, %s144
      %p146 = scmp.eq.s32.totalorder %s36, 0
      %p147 = por %p145, %p146
      %s149 = sadd.s32 %s148, 1
      %p152 = scmp.eq.s32.totalorder %s30, 1
      %p153 = scmp.ne.s32.totalorder %s148, %s150
      %p154 = scmp.eq.s32.totalorder %s30, 0
      %p155 = por %p153, %p154
      %p156 = scmp.ne.s32.totalorder %s148, %s150
      %p157 = scmp.eq.s32.totalorder %s35, 1
      %p158 = por %p156, %p157
      %p159 = scmp.ne.s32.totalorder %s150, %s151
      %p160 = scmp.eq.s32.totalorder %s35, 0
      %p161 = por %p159, %p160
      %p162 = scmp.ne.s32.totalorder %s150, %s151
      %p163 = scmp.eq.s32.totalorder %s36, 1
      %p164 = por %p162, %p163
      %p166 = scmp.ne.s32.totalorder %s151, %s165
      %p167 = scmp.eq.s32.totalorder %s36, 0
      %p168 = por %p166, %p167
      %s170 = sadd.s32 %s169, 1
      %p173 = scmp.eq.s32.totalorder %s30, 1
      %p174 = scmp.ne.s32.totalorder %s169, %s171
      %p175 = scmp.eq.s32.totalorder %s30, 0
      %p176 = por %p174, %p175
      %p177 = scmp.ne.s32.totalorder %s169, %s171
      %p178 = scmp.eq.s32.totalorder %s35, 1
      %p179 = por %p177, %p178
      %p180 = scmp.ne.s32.totalorder %s171, %s172
      %p181 = scmp.eq.s32.totalorder %s35, 0
      %p182 = por %p180, %p181
      %p183 = scmp.ne.s32.totalorder %s171, %s172
      %p184 = scmp.eq.s32.totalorder %s36, 1
      %p185 = por %p183, %p184
      %p187 = scmp.ne.s32.totalorder %s172, %s186
      %p188 = scmp.eq.s32.totalorder %s36, 0
      %p189 = por %p187, %p188
      %s191 = sadd.s32 %s190, 1
      %p194 = scmp.eq.s32.totalorder %s30, 1
      %p195 = scmp.ne.s32.totalorder %s190, %s192
      %p196 = scmp.eq.s32.totalorder %s30, 0
      %p197 = por %p195, %p196
      %p198 = scmp.ne.s32.totalorder %s190, %s192
      %p199 = scmp.eq.s32.totalorder %s35, 1
      %p200 = por %p198, %p199
      %p201 = scmp.ne.s32.totalorder %s192, %s193
      %p202 = scmp.eq.s32.totalorder %s35, 0
      %p203 = por %p201, %p202
      %p204 = scmp.ne.s32.totalorder %s192, %s193
      %p205 = scmp.eq.s32.totalorder %s36, 1
      %p206 = por %p204, %p205
      %p208 = scmp.ne.s32.totalorder %s193, %s207
      %p209 = scmp.eq.s32.totalorder %s36, 0
      %p210 = por %p208, %p209
      %s212 = sadd.s32 %s211, 1
      %p215 = scmp.eq.s32.totalorder %s30, 1
      %p216 = scmp.ne.s32.totalorder %s211, %s213
      %p217 = scmp.eq.s32.totalorder %s30, 0
      %p218 = por %p216, %p217
      %p219 = scmp.ne.s32.totalorder %s211, %s213
      %p220 = scmp.eq.s32.totalorder %s35, 1
      %p221 = por %p219, %p220
      %p222 = scmp.ne.s32.totalorder %s213, %s214
      %p223 = scmp.eq.s32.totalorder %s35, 0
      %p224 = por %p222, %p223
      %p225 = scmp.ne.s32.totalorder %s213, %s214
      %p226 = scmp.eq.s32.totalorder %s36, 1
      %p227 = por %p225, %p226
      %p229 = scmp.ne.s32.totalorder %s214, %s228
      %p230 = scmp.eq.s32.totalorder %s36, 0
      %p231 = por %p229, %p230
      %s233 = sadd.s32 %s232, 1
      %p236 = scmp.eq.s32.totalorder %s30, 1
      %p237 = scmp.ne.s32.totalorder %s232, %s234
      %p238 = scmp.eq.s32.totalorder %s30, 0
      %p239 = por %p237, %p238
      %p240 = scmp.ne.s32.totalorder %s232, %s234
      %p241 = scmp.eq.s32.totalorder %s35, 1
      %p242 = por %p240, %p241
      %p243 = scmp.ne.s32.totalorder %s234, %s235
      %p244 = scmp.eq.s32.totalorder %s35, 0
      %p245 = por %p243, %p244
      %p246 = scmp.ne.s32.totalorder %s234, %s235
      %p247 = scmp.eq.s32.totalorder %s36, 1
      %p248 = por %p246, %p247
      %p250 = scmp.ne.s32.totalorder %s235, %s249
      %p251 = scmp.eq.s32.totalorder %s36, 0
      %p252 = por %p250, %p251
      %s253 = ssub.s32 %s30, %s37
      %p254 = scmp.eq.s32.totalorder %s253, 0
      %s256 = sadd.s32 %s255, 1
      %s257 = scalar_select %p254, %s255, %s256
      %p260 = pneg %p254
      %p261 = scmp.eq.s32.totalorder %s30, 1
      %p262 = por %p260, %p261
      %p263 = scmp.ne.s32.totalorder %s255, %s258
      %p264 = scmp.eq.s32.totalorder %s30, 0
      %p265 = por %p263, %p264
      %p266 = scmp.ne.s32.totalorder %s255, %s258
      %p267 = scmp.eq.s32.totalorder %s35, 1
      %p268 = por %p266, %p267
      %p269 = scmp.ne.s32.totalorder %s258, %s259
      %p270 = scmp.eq.s32.totalorder %s35, 0
      %p271 = por %p269, %p270
      %p272 = scmp.ne.s32.totalorder %s258, %s259
      %p273 = scmp.eq.s32.totalorder %s36, 1
      %p274 = por %p272, %p273
      %p276 = scmp.ne.s32.totalorder %s259, %s275
      %p277 = scmp.eq.s32.totalorder %s36, 0
      %p278 = por %p276, %p277
      %s279 = ssub.s32 %s30, %s37
      %p280 = scmp.eq.s32.totalorder %s279, 0
      %s282 = sadd.s32 %s281, 1
      %s283 = scalar_select %p280, %s281, %s282
      %p286 = pneg %p280
      %p287 = scmp.eq.s32.totalorder %s30, 1
      %p288 = por %p286, %p287
      %p289 = scmp.ne.s32.totalorder %s281, %s284
      %p290 = scmp.eq.s32.totalorder %s30, 0
      %p291 = por %p289, %p290
      %p292 = scmp.ne.s32.totalorder %s281, %s284
      %p293 = scmp.eq.s32.totalorder %s35, 1
      %p294 = por %p292, %p293
      %p295 = scmp.ne.s32.totalorder %s284, %s285
      %p296 = scmp.eq.s32.totalorder %s35, 0
      %p297 = por %p295, %p296
      %p298 = scmp.ne.s32.totalorder %s284, %s285
      %p299 = scmp.eq.s32.totalorder %s36, 1
      %p300 = por %p298, %p299
      %p302 = scmp.ne.s32.totalorder %s285, %s301
      %p303 = scmp.eq.s32.totalorder %s36, 0
      %p304 = por %p302, %p303
      %p305 = scmp.le.s32.totalorder 1, %s30
      %p306 = scmp.lt.s32.totalorder %s30, 3
      %p307 = pnand %p305, %p306
      %p308 = pneg %p307
      // Predicated region
      $region9: #{tpu_custom_call.1} parent=5 // pred_check
        _
      $region10: #{tpu_custom_call.1} parent=5 // pred_check_branch
        %310 = sbr.rel (%p307) target = $region12
      $region11: #{tpu_custom_call.1} parent=5 // pred_region
        %s311 = ssub.s32 %s30, 1
        // Predicated region
        $region13: #{tpu_custom_call.1} parent=11 // pred_check
          %p312 = pneg %p51
        $region14: #{tpu_custom_call.1} parent=11 // pred_check_branch
          %314 = sbr.rel (%p312) target = $region16
        $region15: #{tpu_custom_call.1} parent=11 // pred_region
          _
        $region16: #{tpu_custom_call.1} parent=11 // pred_fallthru
          _
        // Predicated region
        $region17: #{tpu_custom_call.1} parent=11 // pred_check
          %p315 = pneg %p98
        $region18: #{tpu_custom_call.1} parent=11 // pred_check_branch
          %317 = sbr.rel (%p315) target = $region20
        $region19: #{tpu_custom_call.1} parent=11 // pred_region
          %319 = vsyncadd [#allocation7], 0
          %s320 = sshll.u32 %s2, 4
          %s321 = int_to_ptr.hbm [resolvable:$true] %s320
          %s322 = sshll.u32 [#allocation6], 4
          %s323 = int_to_ptr.vmem [resolvable:$true] %s322
          %328 = dma.hbm_to_vmem [thread:$0]  %s321, 4096, %s323, [#allocation7], 256, 256, 16
        $region20: #{tpu_custom_call.1} parent=11 // pred_fallthru
          _
        // Predicated region
        $region21: #{tpu_custom_call.1} parent=11 // pred_check
          %p329 = pneg %p119
        $region22: #{tpu_custom_call.1} parent=11 // pred_check_branch
          %331 = sbr.rel (%p329) target = $region24
        $region23: #{tpu_custom_call.1} parent=11 // pred_region
          _
        $region24: #{tpu_custom_call.1} parent=11 // pred_fallthru
          _
        // Predicated region
        $region25: #{tpu_custom_call.1} parent=11 // pred_check
          %p332 = pneg %p140
        $region26: #{tpu_custom_call.1} parent=11 // pred_check_branch
          %334 = sbr.rel (%p332) target = $region28
        $region27: #{tpu_custom_call.1} parent=11 // pred_region
          %336 = vsyncadd [#allocation7], 0
          %s337 = sshll.u32 %s4, 4
          %s338 = int_to_ptr.hbm [resolvable:$true] %s337
          %s339 = sshll.u32 [#allocation8], 4
          %s340 = int_to_ptr.vmem [resolvable:$true] %s339
          %345 = dma.hbm_to_vmem [thread:$0]  %s338, 8192, %s340, [#allocation7], 256, 256, 16
        $region28: #{tpu_custom_call.1} parent=11 // pred_fallthru
          _
        // Predicated region
        $region29: #{tpu_custom_call.1} parent=11 // pred_check
          %p346 = pneg %p161
        $region30: #{tpu_custom_call.1} parent=11 // pred_check_branch
          %348 = sbr.rel (%p346) target = $region32
        $region31: #{tpu_custom_call.1} parent=11 // pred_region
          _
        $region32: #{tpu_custom_call.1} parent=11 // pred_fallthru
          _
        // Predicated region
        $region33: #{tpu_custom_call.1} parent=11 // pred_check
          %p349 = pneg %p182
        $region34: #{tpu_custom_call.1} parent=11 // pred_check_branch
          %351 = sbr.rel (%p349) target = $region36
        $region35: #{tpu_custom_call.1} parent=11 // pred_region
          %353 = vsyncadd [#allocation10], 0
          %s354 = sshll.u32 %s6, 4
          %s355 = int_to_ptr.hbm [resolvable:$true] %s354
          %s356 = sshll.u32 [#allocation9], 4
          %s357 = int_to_ptr.vmem [resolvable:$true] %s356
          %362 = dma.hbm_to_vmem [thread:$0]  %s355, 4096, %s357, [#allocation10], 128, 128, 8
        $region36: #{tpu_custom_call.1} parent=11 // pred_fallthru
          _
        // Predicated region
        $region37: #{tpu_custom_call.1} parent=11 // pred_check
          %p363 = pneg %p203
        $region38: #{tpu_custom_call.1} parent=11 // pred_check_branch
          %365 = sbr.rel (%p363) target = $region40
        $region39: #{tpu_custom_call.1} parent=11 // pred_region
          _
        $region40: #{tpu_custom_call.1} parent=11 // pred_fallthru
          _
        // Predicated region
        $region41: #{tpu_custom_call.1} parent=11 // pred_check
          %p366 = pneg %p224
        $region42: #{tpu_custom_call.1} parent=11 // pred_check_branch
          %368 = sbr.rel (%p366) target = $region44
        $region43: #{tpu_custom_call.1} parent=11 // pred_region
          %370 = vsyncadd [#allocation10], 0
          %s371 = sshll.u32 %s8, 4
          %s372 = int_to_ptr.hbm [resolvable:$true] %s371
          %s373 = sshll.u32 [#allocation11], 4
          %s374 = int_to_ptr.vmem [resolvable:$true] %s373
          %379 = dma.hbm_to_vmem [thread:$0]  %s372, 4096, %s374, [#allocation10], 128, 128, 8
        $region44: #{tpu_custom_call.1} parent=11 // pred_fallthru
          _
        // Predicated region
        $region45: #{tpu_custom_call.1} parent=11 // pred_check
          %p380 = pneg %p245
        $region46: #{tpu_custom_call.1} parent=11 // pred_check_branch
          %382 = sbr.rel (%p380) target = $region48
        $region47: #{tpu_custom_call.1} parent=11 // pred_region
          _
        $region48: #{tpu_custom_call.1} parent=11 // pred_fallthru
          _
      $region12: #{tpu_custom_call.1} parent=5 // pred_fallthru
        _
      %p383 = scmp.lt.s32.totalorder %s30, 2
      // Predicated region
      $region49: #{tpu_custom_call.1} parent=5 // pred_check
        %p384 = pneg %p383
      $region50: #{tpu_custom_call.1} parent=5 // pred_check_branch
        %386 = sbr.rel (%p384) target = $region52
      $region51: #{tpu_custom_call.1} parent=5 // pred_region
        // Predicated region
        $region53: #{tpu_custom_call.1} parent=51 // pred_check
          %p387 = pneg %p71
        $region54: #{tpu_custom_call.1} parent=51 // pred_check_branch
          %389 = sbr.rel (%p387) target = $region56
        $region55: #{tpu_custom_call.1} parent=51 // pred_region
          %s390 = sand.u32 %s61, 1
          %s391 = scalar_lea.sflag [#allocation4], %s390
          %s392 = sand.u32 %s61, 1
          %s393 = smul.addr %s392, 128
          %s394 = scalar_lea.vmem [#allocation3], %s393
          %s395 = smul.u32 16, %s30
          %397 = vsyncadd %s391, 0
          %s398 = smul.addr %s395, 8
          %s399 = scalar_lea.hbm %s1, %s398
          %s400 = sshll.u32 %s399, 4
          %s401 = int_to_ptr.hbm [resolvable:$true] %s400
          %s402 = sshll.u32 %s394, 4
          %s403 = int_to_ptr.vmem [resolvable:$true] %s402
          %408 = dma.hbm_to_vmem [thread:$0]  %s401, 2048, %s403, %s391, 128, 128, 8
        $region56: #{tpu_custom_call.1} parent=51 // pred_fallthru
          _
      $region52: #{tpu_custom_call.1} parent=5 // pred_fallthru
        _
      %p409 = scmp.le.s32.totalorder 1, %s30
      %p410 = scmp.lt.s32.totalorder %s30, 3
      %p411 = pnand %p409, %p410
      %p412 = pneg %p411
      // Predicated region
      $region57: #{tpu_custom_call.1} parent=5 // pred_check
        _
      $region58: #{tpu_custom_call.1} parent=5 // pred_check_branch
        %414 = sbr.rel (%p411) target = $region60
      $region59: #{tpu_custom_call.1} parent=5 // pred_region
        %s415 = ssub.s32 %s30, 1
        %s416 = sand.u32 %s64, 1
        %s417 = scalar_lea.sflag [#allocation4], %s416
        %s418 = sand.u32 %s64, 1
        %s419 = smul.addr %s418, 128
        %s420 = scalar_lea.vmem [#allocation3], %s419
        // Predicated region
        $region61: #{tpu_custom_call.1} parent=59 // pred_check
          %p421 = pneg %p77
        $region62: #{tpu_custom_call.1} parent=59 // pred_check_branch
          %423 = sbr.rel (%p421) target = $region64
        $region63: #{tpu_custom_call.1} parent=59 // pred_region
          %425 = dma.done %s417, 2048
        $region64: #{tpu_custom_call.1} parent=59 // pred_fallthru
          _
        // Predicated region
        $region65: #{tpu_custom_call.1} parent=59 // pred_check
          %p426 = pneg %p98
        $region66: #{tpu_custom_call.1} parent=59 // pred_check_branch
          %428 = sbr.rel (%p426) target = $region68
        $region67: #{tpu_custom_call.1} parent=59 // pred_region
          %430 = dma.done [#allocation7], 4096
        $region68: #{tpu_custom_call.1} parent=59 // pred_fallthru
          _
        // Predicated region
        $region69: #{tpu_custom_call.1} parent=59 // pred_check
          %p431 = pneg %p140
        $region70: #{tpu_custom_call.1} parent=59 // pred_check_branch
          %433 = sbr.rel (%p431) target = $region72
        $region71: #{tpu_custom_call.1} parent=59 // pred_region
          %435 = dma.done [#allocation7], 8192
        $region72: #{tpu_custom_call.1} parent=59 // pred_fallthru
          _
        // Predicated region
        $region73: #{tpu_custom_call.1} parent=59 // pred_check
          %p436 = pneg %p182
        $region74: #{tpu_custom_call.1} parent=59 // pred_check_branch
          %438 = sbr.rel (%p436) target = $region76
        $region75: #{tpu_custom_call.1} parent=59 // pred_region
          %440 = dma.done [#allocation10], 4096
        $region76: #{tpu_custom_call.1} parent=59 // pred_fallthru
          _
        // Predicated region
        $region77: #{tpu_custom_call.1} parent=59 // pred_check
          %p441 = pneg %p224
        $region78: #{tpu_custom_call.1} parent=59 // pred_check_branch
          %443 = sbr.rel (%p441) target = $region80
        $region79: #{tpu_custom_call.1} parent=59 // pred_region
          %445 = dma.done [#allocation10], 4096
        $region80: #{tpu_custom_call.1} parent=59 // pred_fallthru
          _
        %p446 = pneg %p51
        %p447 = pneg %p48
        %s448 = sand.u32 %s64, 1
        %s449 = scalar_lea.sflag [#allocation4], %s448
        %s450 = sand.u32 %s64, 1
        %s451 = smul.addr %s450, 128
        %s452 = scalar_lea.vmem [#allocation3], %s451
        %p453 = pneg %p77
        %p454 = pneg %p74
        %p455 = pneg %p98
        %p456 = pneg %p95
        %p457 = pneg %p119
        %p458 = pneg %p116
        %p459 = pneg %p140
        %p460 = pneg %p137
        %p461 = pneg %p161
        %p462 = pneg %p158
        %p463 = pneg %p182
        %p464 = pneg %p179
        %p465 = pneg %p203
        %p466 = pneg %p200
        %p467 = pneg %p224
        %p468 = pneg %p221
        %p469 = pneg %p245
        %p470 = pneg %p242
        %p471 = pneg %p271
        %p472 = pneg %p268
        %s473 = sand.u32 %s258, 1
        %s474 = scalar_lea.sflag [#allocation5], %s473
        %s475 = sand.u32 %s258, 1
        %s476 = smul.addr %s475, 128
        %s477 = scalar_lea.vmem [#allocation12], %s476
        %p478 = pneg %p297
        %p479 = pneg %p294
        %s480 = sand.u32 %s284, 1
        %s481 = scalar_lea.sflag [#allocation14], %s480
        %s482 = sand.u32 %s284, 1
        %s483 = smul.addr %s482, 128
        %s484 = scalar_lea.vmem [#allocation13], %s483
        %s485 = smul.u32 16, %s35
        %s486 = smul.u32 16, %s35
        %s487 = smul.u32 16, %s35
        %v488 = vld [vmem:[%s420] sm:$0xff]
        %v489 = vld [vmem:[%s420 + $0x8] sm:$0xff]
        %v490 = vld [vmem:[%s420 + $0x10] sm:$0xff]
        %v491 = vld [vmem:[%s420 + $0x18] sm:$0xff]
        %v492 = vld [vmem:[%s420 + $0x20] sm:$0xff]
        %v493 = vld [vmem:[%s420 + $0x28] sm:$0xff]
        %v494 = vld [vmem:[%s420 + $0x30] sm:$0xff]
        %v495 = vld [vmem:[%s420 + $0x38] sm:$0xff]
        %v496 = vld [vmem:[%s420 + $0x40] sm:$0xff]
        %v497 = vld [vmem:[%s420 + $0x48] sm:$0xff]
        %v498 = vld [vmem:[%s420 + $0x50] sm:$0xff]
        %v499 = vld [vmem:[%s420 + $0x58] sm:$0xff]
        %v500 = vld [vmem:[%s420 + $0x60] sm:$0xff]
        %v501 = vld [vmem:[%s420 + $0x68] sm:$0xff]
        %v502 = vld [vmem:[%s420 + $0x70] sm:$0xff]
        %v503 = vld [vmem:[%s420 + $0x78] sm:$0xff]
        %v504 = vld [vmem:[#allocation6] sm:$0xff]
        %v505 = vld [vmem:[#allocation6 + $0x8] sm:$0xff]
        %v506 = vld [vmem:[#allocation6 + $0x10] sm:$0xff]
        %v507 = vld [vmem:[#allocation6 + $0x18] sm:$0xff]
        %v508 = vld [vmem:[#allocation6 + $0x20] sm:$0xff]
        %v509 = vld [vmem:[#allocation6 + $0x28] sm:$0xff]
        %v510 = vld [vmem:[#allocation6 + $0x30] sm:$0xff]
        %v511 = vld [vmem:[#allocation6 + $0x38] sm:$0xff]
        %v512 = vld [vmem:[#allocation6 + $0x40] sm:$0xff]
        %v513 = vld [vmem:[#allocation6 + $0x48] sm:$0xff]
        %v514 = vld [vmem:[#allocation6 + $0x50] sm:$0xff]
        %v515 = vld [vmem:[#allocation6 + $0x58] sm:$0xff]
        %v516 = vld [vmem:[#allocation6 + $0x60] sm:$0xff]
        %v517 = vld [vmem:[#allocation6 + $0x68] sm:$0xff]
        %v518 = vld [vmem:[#allocation6 + $0x70] sm:$0xff]
        %v519 = vld [vmem:[#allocation6 + $0x78] sm:$0xff]
        %v520 = vld [vmem:[#allocation6 + $0x80] sm:$0xff]
        %v521 = vld [vmem:[#allocation6 + $0x88] sm:$0xff]
        %v522 = vld [vmem:[#allocation6 + $0x90] sm:$0xff]
        %v523 = vld [vmem:[#allocation6 + $0x98] sm:$0xff]
        %v524 = vld [vmem:[#allocation6 + $0xa0] sm:$0xff]
        %v525 = vld [vmem:[#allocation6 + $0xa8] sm:$0xff]
        %v526 = vld [vmem:[#allocation6 + $0xb0] sm:$0xff]
        %v527 = vld [vmem:[#allocation6 + $0xb8] sm:$0xff]
        %v528 = vld [vmem:[#allocation6 + $0xc0] sm:$0xff]
        %v529 = vld [vmem:[#allocation6 + $0xc8] sm:$0xff]
        %v530 = vld [vmem:[#allocation6 + $0xd0] sm:$0xff]
        %v531 = vld [vmem:[#allocation6 + $0xd8] sm:$0xff]
        %v532 = vld [vmem:[#allocation6 + $0xe0] sm:$0xff]
        %v533 = vld [vmem:[#allocation6 + $0xe8] sm:$0xff]
        %v534 = vld [vmem:[#allocation6 + $0xf0] sm:$0xff]
        %v535 = vld [vmem:[#allocation6 + $0xf8] sm:$0xff]
        %v536 = vld [vmem:[%s3] sm:$0x3]
        %v538 = vperm.slane %v536, 0
        %v539 = vperm.slane %v536, 1
        %542 = vmatpush.msra.mxu0 %v534
        %543 = vmatpush.msra.mxu0 %v532
        %544 = vmatpush.msra.mxu0 %v530
        %545 = vmatpush.msra.mxu0 %v528
        %546 = vmatpush.msra.mxu0 %v526
        %547 = vmatpush.msra.mxu0 %v524
        %548 = vmatpush.msra.mxu0 %v522
        %549 = vmatpush.msra.mxu0 %v520
        %550 = vmatpush.msra.mxu0 %v518
        %551 = vmatpush.msra.mxu0 %v516
        %552 = vmatpush.msra.mxu0 %v514
        %553 = vmatpush.msra.mxu0 %v512
        %554 = vmatpush.msra.mxu0 %v510
        %555 = vmatpush.msra.mxu0 %v508
        %556 = vmatpush.msra.mxu0 %v506
        %557 = vmatpush.msra.mxu0 %v504
        %558 = vmatmul.f32.gmra.mxu0 %v488
        %v559 = vpop.f32.mrf.mxu0
        %v560 = vadd.f32 %v538, %v559
        %561 = vmatmul.f32.gmra.mxu0 %v489
        %v562 = vpop.f32.mrf.mxu0
        %v563 = vadd.f32 %v538, %v562
        %564 = vmatmul.f32.gmra.mxu0 %v490
        %v565 = vpop.f32.mrf.mxu0
        %v566 = vadd.f32 %v538, %v565
        %567 = vmatmul.f32.gmra.mxu0 %v491
        %v568 = vpop.f32.mrf.mxu0
        %v569 = vadd.f32 %v538, %v568
        %570 = vmatmul.f32.gmra.mxu0 %v492
        %v571 = vpop.f32.mrf.mxu0
        %v572 = vadd.f32 %v538, %v571
        %573 = vmatmul.f32.gmra.mxu0 %v493
        %v574 = vpop.f32.mrf.mxu0
        %v575 = vadd.f32 %v538, %v574
        %576 = vmatmul.f32.gmra.mxu0 %v494
        %v577 = vpop.f32.mrf.mxu0
        %v578 = vadd.f32 %v538, %v577
        %579 = vmatmul.f32.gmra.mxu0 %v495
        %v580 = vpop.f32.mrf.mxu0
        %v581 = vadd.f32 %v538, %v580
        %582 = vmatmul.f32.gmra.mxu0 %v496
        %v583 = vpop.f32.mrf.mxu0
        %v584 = vadd.f32 %v538, %v583
        %585 = vmatmul.f32.gmra.mxu0 %v497
        %v586 = vpop.f32.mrf.mxu0
        %v587 = vadd.f32 %v538, %v586
        %588 = vmatmul.f32.gmra.mxu0 %v498
        %v589 = vpop.f32.mrf.mxu0
        %v590 = vadd.f32 %v538, %v589
        %591 = vmatmul.f32.gmra.mxu0 %v499
        %v592 = vpop.f32.mrf.mxu0
        %v593 = vadd.f32 %v538, %v592
        %594 = vmatmul.f32.gmra.mxu0 %v500
        %v595 = vpop.f32.mrf.mxu0
        %v596 = vadd.f32 %v538, %v595
        %597 = vmatmul.f32.gmra.mxu0 %v501
        %v598 = vpop.f32.mrf.mxu0
        %v599 = vadd.f32 %v538, %v598
        %600 = vmatmul.f32.gmra.mxu0 %v502
        %v601 = vpop.f32.mrf.mxu0
        %v602 = vadd.f32 %v538, %v601
        %603 = vmatmul.f32.gmra.mxu0 %v503
        %v604 = vpop.f32.mrf.mxu0
        %v605 = vadd.f32 %v538, %v604
        %606 = vdwg.mxu0
        %607 = vmatpush.msra.mxu0 %v535
        %608 = vmatpush.msra.mxu0 %v533
        %609 = vmatpush.msra.mxu0 %v531
        %610 = vmatpush.msra.mxu0 %v529
        %611 = vmatpush.msra.mxu0 %v527
        %612 = vmatpush.msra.mxu0 %v525
        %613 = vmatpush.msra.mxu0 %v523
        %614 = vmatpush.msra.mxu0 %v521
        %615 = vmatpush.msra.mxu0 %v519
        %616 = vmatpush.msra.mxu0 %v517
        %617 = vmatpush.msra.mxu0 %v515
        %618 = vmatpush.msra.mxu0 %v513
        %619 = vmatpush.msra.mxu0 %v511
        %620 = vmatpush.msra.mxu0 %v509
        %621 = vmatpush.msra.mxu0 %v507
        %622 = vmatpush.msra.mxu0 %v505
        %623 = vmatmul.f32.gmra.mxu0 %v488
        %v624 = vpop.f32.mrf.mxu0
        %v625 = vadd.f32 %v539, %v624
        %626 = vmatmul.f32.gmra.mxu0 %v489
        %v627 = vpop.f32.mrf.mxu0
        %v628 = vadd.f32 %v539, %v627
        %629 = vmatmul.f32.gmra.mxu0 %v490
        %v630 = vpop.f32.mrf.mxu0
        %v631 = vadd.f32 %v539, %v630
        %632 = vmatmul.f32.gmra.mxu0 %v491
        %v633 = vpop.f32.mrf.mxu0
        %v634 = vadd.f32 %v539, %v633
        %635 = vmatmul.f32.gmra.mxu0 %v492
        %v636 = vpop.f32.mrf.mxu0
        %v637 = vadd.f32 %v539, %v636
        %638 = vmatmul.f32.gmra.mxu0 %v493
        %v639 = vpop.f32.mrf.mxu0
        %v640 = vadd.f32 %v539, %v639
        %641 = vmatmul.f32.gmra.mxu0 %v494
        %v642 = vpop.f32.mrf.mxu0
        %v643 = vadd.f32 %v539, %v642
        %644 = vmatmul.f32.gmra.mxu0 %v495
        %v645 = vpop.f32.mrf.mxu0
        %v646 = vadd.f32 %v539, %v645
        %647 = vmatmul.f32.gmra.mxu0 %v496
        %v648 = vpop.f32.mrf.mxu0
        %v649 = vadd.f32 %v539, %v648
        %650 = vmatmul.f32.gmra.mxu0 %v497
        %v651 = vpop.f32.mrf.mxu0
        %v652 = vadd.f32 %v539, %v651
        %653 = vmatmul.f32.gmra.mxu0 %v498
        %v654 = vpop.f32.mrf.mxu0
        %v655 = vadd.f32 %v539, %v654
        %656 = vmatmul.f32.gmra.mxu0 %v499
        %v657 = vpop.f32.mrf.mxu0
        %v658 = vadd.f32 %v539, %v657
        %659 = vmatmul.f32.gmra.mxu0 %v500
        %v660 = vpop.f32.mrf.mxu0
        %v661 = vadd.f32 %v539, %v660
        %662 = vmatmul.f32.gmra.mxu0 %v501
        %v663 = vpop.f32.mrf.mxu0
        %v664 = vadd.f32 %v539, %v663
        %665 = vmatmul.f32.gmra.mxu0 %v502
        %v666 = vpop.f32.mrf.mxu0
        %v667 = vadd.f32 %v539, %v666
        %668 = vmatmul.f32.gmra.mxu0 %v503
        %v669 = vpop.f32.mrf.mxu0
        %v670 = vadd.f32 %v539, %v669
        %671 = vdwg.mxu0
        %v672 = vmax.f32 %v560, 0.0
        %v673 = vmax.f32 %v625, 0.0
        %v674 = vmax.f32 %v563, 0.0
        %v675 = vmax.f32 %v628, 0.0
        %v676 = vmax.f32 %v566, 0.0
        %v677 = vmax.f32 %v631, 0.0
        %v678 = vmax.f32 %v569, 0.0
        %v679 = vmax.f32 %v634, 0.0
        %v680 = vmax.f32 %v572, 0.0
        %v681 = vmax.f32 %v637, 0.0
        %v682 = vmax.f32 %v575, 0.0
        %v683 = vmax.f32 %v640, 0.0
        %v684 = vmax.f32 %v578, 0.0
        %v685 = vmax.f32 %v643, 0.0
        %v686 = vmax.f32 %v581, 0.0
        %v687 = vmax.f32 %v646, 0.0
        %v688 = vmax.f32 %v584, 0.0
        %v689 = vmax.f32 %v649, 0.0
        %v690 = vmax.f32 %v587, 0.0
        %v691 = vmax.f32 %v652, 0.0
        %v692 = vmax.f32 %v590, 0.0
        %v693 = vmax.f32 %v655, 0.0
        %v694 = vmax.f32 %v593, 0.0
        %v695 = vmax.f32 %v658, 0.0
        %v696 = vmax.f32 %v596, 0.0
        %v697 = vmax.f32 %v661, 0.0
        %v698 = vmax.f32 %v599, 0.0
        %v699 = vmax.f32 %v664, 0.0
        %v700 = vmax.f32 %v602, 0.0
        %v701 = vmax.f32 %v667, 0.0
        %v702 = vmax.f32 %v605, 0.0
        %v703 = vmax.f32 %v670, 0.0
        %v704 = vld [vmem:[#allocation8] sm:$0xff]
        %v705 = vld [vmem:[#allocation8 + $0x8] sm:$0xff]
        %v706 = vld [vmem:[#allocation8 + $0x10] sm:$0xff]
        %v707 = vld [vmem:[#allocation8 + $0x18] sm:$0xff]
        %v708 = vld [vmem:[#allocation8 + $0x20] sm:$0xff]
        %v709 = vld [vmem:[#allocation8 + $0x28] sm:$0xff]
        %v710 = vld [vmem:[#allocation8 + $0x30] sm:$0xff]
        %v711 = vld [vmem:[#allocation8 + $0x38] sm:$0xff]
        %v712 = vld [vmem:[#allocation8 + $0x40] sm:$0xff]
        %v713 = vld [vmem:[#allocation8 + $0x48] sm:$0xff]
        %v714 = vld [vmem:[#allocation8 + $0x50] sm:$0xff]
        %v715 = vld [vmem:[#allocation8 + $0x58] sm:$0xff]
        %v716 = vld [vmem:[#allocation8 + $0x60] sm:$0xff]
        %v717 = vld [vmem:[#allocation8 + $0x68] sm:$0xff]
        %v718 = vld [vmem:[#allocation8 + $0x70] sm:$0xff]
        %v719 = vld [vmem:[#allocation8 + $0x78] sm:$0xff]
        %v720 = vld [vmem:[#allocation8 + $0x80] sm:$0xff]
        %v721 = vld [vmem:[#allocation8 + $0x88] sm:$0xff]
        %v722 = vld [vmem:[#allocation8 + $0x90] sm:$0xff]
        %v723 = vld [vmem:[#allocation8 + $0x98] sm:$0xff]
        %v724 = vld [vmem:[#allocation8 + $0xa0] sm:$0xff]
        %v725 = vld [vmem:[#allocation8 + $0xa8] sm:$0xff]
        %v726 = vld [vmem:[#allocation8 + $0xb0] sm:$0xff]
        %v727 = vld [vmem:[#allocation8 + $0xb8] sm:$0xff]
        %v728 = vld [vmem:[#allocation8 + $0xc0] sm:$0xff]
        %v729 = vld [vmem:[#allocation8 + $0xc8] sm:$0xff]
        %v730 = vld [vmem:[#allocation8 + $0xd0] sm:$0xff]
        %v731 = vld [vmem:[#allocation8 + $0xd8] sm:$0xff]
        %v732 = vld [vmem:[#allocation8 + $0xe0] sm:$0xff]
        %v733 = vld [vmem:[#allocation8 + $0xe8] sm:$0xff]
        %v734 = vld [vmem:[#allocation8 + $0xf0] sm:$0xff]
        %v735 = vld [vmem:[#allocation8 + $0xf8] sm:$0xff]
        %v736 = vld [vmem:[#allocation8 + $0x100] sm:$0xff]
        %v737 = vld [vmem:[#allocation8 + $0x108] sm:$0xff]
        %v738 = vld [vmem:[#allocation8 + $0x110] sm:$0xff]
        %v739 = vld [vmem:[#allocation8 + $0x118] sm:$0xff]
        %v740 = vld [vmem:[#allocation8 + $0x120] sm:$0xff]
        %v741 = vld [vmem:[#allocation8 + $0x128] sm:$0xff]
        %v742 = vld [vmem:[#allocation8 + $0x130] sm:$0xff]
        %v743 = vld [vmem:[#allocation8 + $0x138] sm:$0xff]
        %v744 = vld [vmem:[#allocation8 + $0x140] sm:$0xff]
        %v745 = vld [vmem:[#allocation8 + $0x148] sm:$0xff]
        %v746 = vld [vmem:[#allocation8 + $0x150] sm:$0xff]
        %v747 = vld [vmem:[#allocation8 + $0x158] sm:$0xff]
        %v748 = vld [vmem:[#allocation8 + $0x160] sm:$0xff]
        %v749 = vld [vmem:[#allocation8 + $0x168] sm:$0xff]
        %v750 = vld [vmem:[#allocation8 + $0x170] sm:$0xff]
        %v751 = vld [vmem:[#allocation8 + $0x178] sm:$0xff]
        %v752 = vld [vmem:[#allocation8 + $0x180] sm:$0xff]
        %v753 = vld [vmem:[#allocation8 + $0x188] sm:$0xff]
        %v754 = vld [vmem:[#allocation8 + $0x190] sm:$0xff]
        %v755 = vld [vmem:[#allocation8 + $0x198] sm:$0xff]
        %v756 = vld [vmem:[#allocation8 + $0x1a0] sm:$0xff]
        %v757 = vld [vmem:[#allocation8 + $0x1a8] sm:$0xff]
        %v758 = vld [vmem:[#allocation8 + $0x1b0] sm:$0xff]
        %v759 = vld [vmem:[#allocation8 + $0x1b8] sm:$0xff]
        %v760 = vld [vmem:[#allocation8 + $0x1c0] sm:$0xff]
        %v761 = vld [vmem:[#allocation8 + $0x1c8] sm:$0xff]
        %v762 = vld [vmem:[#allocation8 + $0x1d0] sm:$0xff]
        %v763 = vld [vmem:[#allocation8 + $0x1d8] sm:$0xff]
        %v764 = vld [vmem:[#allocation8 + $0x1e0] sm:$0xff]
        %v765 = vld [vmem:[#allocation8 + $0x1e8] sm:$0xff]
        %v766 = vld [vmem:[#allocation8 + $0x1f0] sm:$0xff]
        %v767 = vld [vmem:[#allocation8 + $0x1f8] sm:$0xff]
        %v768 = vld [vmem:[%s5] sm:$0x3]
        %v770 = vperm.slane %v768, 0
        %v771 = vperm.slane %v768, 1
        %774 = vmatpush.msra.mxu0 %v734
        %775 = vmatpush.msra.mxu0 %v732
        %776 = vmatpush.msra.mxu0 %v730
        %777 = vmatpush.msra.mxu0 %v728
        %778 = vmatpush.msra.mxu0 %v726
        %779 = vmatpush.msra.mxu0 %v724
        %780 = vmatpush.msra.mxu0 %v722
        %781 = vmatpush.msra.mxu0 %v720
        %782 = vmatpush.msra.mxu0 %v718
        %783 = vmatpush.msra.mxu0 %v716
        %784 = vmatpush.msra.mxu0 %v714
        %785 = vmatpush.msra.mxu0 %v712
        %786 = vmatpush.msra.mxu0 %v710
        %787 = vmatpush.msra.mxu0 %v708
        %788 = vmatpush.msra.mxu0 %v706
        %789 = vmatpush.msra.mxu0 %v704
        %790 = vmatmul.f32.gmra.mxu0 %v672
        %v791 = vpop.f32.mrf.mxu0
        %v792 = vadd.f32 %v770, %v791
        %793 = vmatmul.f32.gmra.mxu0 %v674
        %v794 = vpop.f32.mrf.mxu0
        %v795 = vadd.f32 %v770, %v794
        %796 = vmatmul.f32.gmra.mxu0 %v676
        %v797 = vpop.f32.mrf.mxu0
        %v798 = vadd.f32 %v770, %v797
        %799 = vmatmul.f32.gmra.mxu0 %v678
        %v800 = vpop.f32.mrf.mxu0
        %v801 = vadd.f32 %v770, %v800
        %802 = vmatmul.f32.gmra.mxu0 %v680
        %v803 = vpop.f32.mrf.mxu0
        %v804 = vadd.f32 %v770, %v803
        %805 = vmatmul.f32.gmra.mxu0 %v682
        %v806 = vpop.f32.mrf.mxu0
        %v807 = vadd.f32 %v770, %v806
        %808 = vmatmul.f32.gmra.mxu0 %v684
        %v809 = vpop.f32.mrf.mxu0
        %v810 = vadd.f32 %v770, %v809
        %811 = vmatmul.f32.gmra.mxu0 %v686
        %v812 = vpop.f32.mrf.mxu0
        %v813 = vadd.f32 %v770, %v812
        %814 = vmatmul.f32.gmra.mxu0 %v688
        %v815 = vpop.f32.mrf.mxu0
        %v816 = vadd.f32 %v770, %v815
        %817 = vmatmul.f32.gmra.mxu0 %v690
        %v818 = vpop.f32.mrf.mxu0
        %v819 = vadd.f32 %v770, %v818
        %820 = vmatmul.f32.gmra.mxu0 %v692
        %v821 = vpop.f32.mrf.mxu0
        %v822 = vadd.f32 %v770, %v821
        %823 = vmatmul.f32.gmra.mxu0 %v694
        %v824 = vpop.f32.mrf.mxu0
        %v825 = vadd.f32 %v770, %v824
        %826 = vmatmul.f32.gmra.mxu0 %v696
        %v827 = vpop.f32.mrf.mxu0
        %v828 = vadd.f32 %v770, %v827
        %829 = vmatmul.f32.gmra.mxu0 %v698
        %v830 = vpop.f32.mrf.mxu0
        %v831 = vadd.f32 %v770, %v830
        %832 = vmatmul.f32.gmra.mxu0 %v700
        %v833 = vpop.f32.mrf.mxu0
        %v834 = vadd.f32 %v770, %v833
        %835 = vmatmul.f32.gmra.mxu0 %v702
        %v836 = vpop.f32.mrf.mxu0
        %v837 = vadd.f32 %v770, %v836
        %838 = vdwg.mxu0
        %839 = vmatpush.msra.mxu0 %v766
        %840 = vmatpush.msra.mxu0 %v764
        %841 = vmatpush.msra.mxu0 %v762
        %842 = vmatpush.msra.mxu0 %v760
        %843 = vmatpush.msra.mxu0 %v758
        %844 = vmatpush.msra.mxu0 %v756
        %845 = vmatpush.msra.mxu0 %v754
        %846 = vmatpush.msra.mxu0 %v752
        %847 = vmatpush.msra.mxu0 %v750
        %848 = vmatpush.msra.mxu0 %v748
        %849 = vmatpush.msra.mxu0 %v746
        %850 = vmatpush.msra.mxu0 %v744
        %851 = vmatpush.msra.mxu0 %v742
        %852 = vmatpush.msra.mxu0 %v740
        %853 = vmatpush.msra.mxu0 %v738
        %854 = vmatpush.msra.mxu0 %v736
        %855 = vmatmul.f32.gmra.mxu0 %v673
        %v856 = vpop.f32.mrf.mxu0
        %v857 = vadd.f32 %v792, %v856
        %858 = vmatmul.f32.gmra.mxu0 %v675
        %v859 = vpop.f32.mrf.mxu0
        %v860 = vadd.f32 %v795, %v859
        %861 = vmatmul.f32.gmra.mxu0 %v677
        %v862 = vpop.f32.mrf.mxu0
        %v863 = vadd.f32 %v798, %v862
        %864 = vmatmul.f32.gmra.mxu0 %v679
        %v865 = vpop.f32.mrf.mxu0
        %v866 = vadd.f32 %v801, %v865
        %867 = vmatmul.f32.gmra.mxu0 %v681
        %v868 = vpop.f32.mrf.mxu0
        %v869 = vadd.f32 %v804, %v868
        %870 = vmatmul.f32.gmra.mxu0 %v683
        %v871 = vpop.f32.mrf.mxu0
        %v872 = vadd.f32 %v807, %v871
        %873 = vmatmul.f32.gmra.mxu0 %v685
        %v874 = vpop.f32.mrf.mxu0
        %v875 = vadd.f32 %v810, %v874
        %876 = vmatmul.f32.gmra.mxu0 %v687
        %v877 = vpop.f32.mrf.mxu0
        %v878 = vadd.f32 %v813, %v877
        %879 = vmatmul.f32.gmra.mxu0 %v689
        %v880 = vpop.f32.mrf.mxu0
        %v881 = vadd.f32 %v816, %v880
        %882 = vmatmul.f32.gmra.mxu0 %v691
        %v883 = vpop.f32.mrf.mxu0
        %v884 = vadd.f32 %v819, %v883
        %885 = vmatmul.f32.gmra.mxu0 %v693
        %v886 = vpop.f32.mrf.mxu0
        %v887 = vadd.f32 %v822, %v886
        %888 = vmatmul.f32.gmra.mxu0 %v695
        %v889 = vpop.f32.mrf.mxu0
        %v890 = vadd.f32 %v825, %v889
        %891 = vmatmul.f32.gmra.mxu0 %v697
        %v892 = vpop.f32.mrf.mxu0
        %v893 = vadd.f32 %v828, %v892
        %894 = vmatmul.f32.gmra.mxu0 %v699
        %v895 = vpop.f32.mrf.mxu0
        %v896 = vadd.f32 %v831, %v895
        %897 = vmatmul.f32.gmra.mxu0 %v701
        %v898 = vpop.f32.mrf.mxu0
        %v899 = vadd.f32 %v834, %v898
        %900 = vmatmul.f32.gmra.mxu0 %v703
        %v901 = vpop.f32.mrf.mxu0
        %v902 = vadd.f32 %v837, %v901
        %903 = vdwg.mxu0
        %904 = vmatpush.msra.mxu0 %v735
        %905 = vmatpush.msra.mxu0 %v733
        %906 = vmatpush.msra.mxu0 %v731
        %907 = vmatpush.msra.mxu0 %v729
        %908 = vmatpush.msra.mxu0 %v727
        %909 = vmatpush.msra.mxu0 %v725
        %910 = vmatpush.msra.mxu0 %v723
        %911 = vmatpush.msra.mxu0 %v721
        %912 = vmatpush.msra.mxu0 %v719
        %913 = vmatpush.msra.mxu0 %v717
        %914 = vmatpush.msra.mxu0 %v715
        %915 = vmatpush.msra.mxu0 %v713
        %916 = vmatpush.msra.mxu0 %v711
        %917 = vmatpush.msra.mxu0 %v709
        %918 = vmatpush.msra.mxu0 %v707
        %919 = vmatpush.msra.mxu0 %v705
        %920 = vmatmul.f32.gmra.mxu0 %v672
        %v921 = vpop.f32.mrf.mxu0
        %v922 = vadd.f32 %v771, %v921
        %923 = vmatmul.f32.gmra.mxu0 %v674
        %v924 = vpop.f32.mrf.mxu0
        %v925 = vadd.f32 %v771, %v924
        %926 = vmatmul.f32.gmra.mxu0 %v676
        %v927 = vpop.f32.mrf.mxu0
        %v928 = vadd.f32 %v771, %v927
        %929 = vmatmul.f32.gmra.mxu0 %v678
        %v930 = vpop.f32.mrf.mxu0
        %v931 = vadd.f32 %v771, %v930
        %932 = vmatmul.f32.gmra.mxu0 %v680
        %v933 = vpop.f32.mrf.mxu0
        %v934 = vadd.f32 %v771, %v933
        %935 = vmatmul.f32.gmra.mxu0 %v682
        %v936 = vpop.f32.mrf.mxu0
        %v937 = vadd.f32 %v771, %v936
        %938 = vmatmul.f32.gmra.mxu0 %v684
        %v939 = vpop.f32.mrf.mxu0
        %v940 = vadd.f32 %v771, %v939
        %941 = vmatmul.f32.gmra.mxu0 %v686
        %v942 = vpop.f32.mrf.mxu0
        %v943 = vadd.f32 %v771, %v942
        %944 = vmatmul.f32.gmra.mxu0 %v688
        %v945 = vpop.f32.mrf.mxu0
        %v946 = vadd.f32 %v771, %v945
        %947 = vmatmul.f32.gmra.mxu0 %v690
        %v948 = vpop.f32.mrf.mxu0
        %v949 = vadd.f32 %v771, %v948
        %950 = vmatmul.f32.gmra.mxu0 %v692
        %v951 = vpop.f32.mrf.mxu0
        %v952 = vadd.f32 %v771, %v951
        %953 = vmatmul.f32.gmra.mxu0 %v694
        %v954 = vpop.f32.mrf.mxu0
        %v955 = vadd.f32 %v771, %v954
        %956 = vmatmul.f32.gmra.mxu0 %v696
        %v957 = vpop.f32.mrf.mxu0
        %v958 = vadd.f32 %v771, %v957
        %959 = vmatmul.f32.gmra.mxu0 %v698
        %v960 = vpop.f32.mrf.mxu0
        %v961 = vadd.f32 %v771, %v960
        %962 = vmatmul.f32.gmra.mxu0 %v700
        %v963 = vpop.f32.mrf.mxu0
        %v964 = vadd.f32 %v771, %v963
        %965 = vmatmul.f32.gmra.mxu0 %v702
        %v966 = vpop.f32.mrf.mxu0
        %v967 = vadd.f32 %v771, %v966
        %968 = vdwg.mxu0
        %969 = vmatpush.msra.mxu0 %v767
        %970 = vmatpush.msra.mxu0 %v765
        %971 = vmatpush.msra.mxu0 %v763
        %972 = vmatpush.msra.mxu0 %v761
        %973 = vmatpush.msra.mxu0 %v759
        %974 = vmatpush.msra.mxu0 %v757
        %975 = vmatpush.msra.mxu0 %v755
        %976 = vmatpush.msra.mxu0 %v753
        %977 = vmatpush.msra.mxu0 %v751
        %978 = vmatpush.msra.mxu0 %v749
        %979 = vmatpush.msra.mxu0 %v747
        %980 = vmatpush.msra.mxu0 %v745
        %981 = vmatpush.msra.mxu0 %v743
        %982 = vmatpush.msra.mxu0 %v741
        %983 = vmatpush.msra.mxu0 %v739
        %984 = vmatpush.msra.mxu0 %v737
        %985 = vmatmul.f32.gmra.mxu0 %v673
        %v986 = vpop.f32.mrf.mxu0
        %v987 = vadd.f32 %v922, %v986
        %988 = vmatmul.f32.gmra.mxu0 %v675
        %v989 = vpop.f32.mrf.mxu0
        %v990 = vadd.f32 %v925, %v989
        %991 = vmatmul.f32.gmra.mxu0 %v677
        %v992 = vpop.f32.mrf.mxu0
        %v993 = vadd.f32 %v928, %v992
        %994 = vmatmul.f32.gmra.mxu0 %v679
        %v995 = vpop.f32.mrf.mxu0
        %v996 = vadd.f32 %v931, %v995
        %997 = vmatmul.f32.gmra.mxu0 %v681
        %v998 = vpop.f32.mrf.mxu0
        %v999 = vadd.f32 %v934, %v998
        %1000 = vmatmul.f32.gmra.mxu0 %v683
        %v1001 = vpop.f32.mrf.mxu0
        %v1002 = vadd.f32 %v937, %v1001
        %1003 = vmatmul.f32.gmra.mxu0 %v685
        %v1004 = vpop.f32.mrf.mxu0
        %v1005 = vadd.f32 %v940, %v1004
        %1006 = vmatmul.f32.gmra.mxu0 %v687
        %v1007 = vpop.f32.mrf.mxu0
        %v1008 = vadd.f32 %v943, %v1007
        %1009 = vmatmul.f32.gmra.mxu0 %v689
        %v1010 = vpop.f32.mrf.mxu0
        %v1011 = vadd.f32 %v946, %v1010
        %1012 = vmatmul.f32.gmra.mxu0 %v691
        %v1013 = vpop.f32.mrf.mxu0
        %v1014 = vadd.f32 %v949, %v1013
        %1015 = vmatmul.f32.gmra.mxu0 %v693
        %v1016 = vpop.f32.mrf.mxu0
        %v1017 = vadd.f32 %v952, %v1016
        %1018 = vmatmul.f32.gmra.mxu0 %v695
        %v1019 = vpop.f32.mrf.mxu0
        %v1020 = vadd.f32 %v955, %v1019
        %1021 = vmatmul.f32.gmra.mxu0 %v697
        %v1022 = vpop.f32.mrf.mxu0
        %v1023 = vadd.f32 %v958, %v1022
        %1024 = vmatmul.f32.gmra.mxu0 %v699
        %v1025 = vpop.f32.mrf.mxu0
        %v1026 = vadd.f32 %v961, %v1025
        %1027 = vmatmul.f32.gmra.mxu0 %v701
        %v1028 = vpop.f32.mrf.mxu0
        %v1029 = vadd.f32 %v964, %v1028
        %1030 = vmatmul.f32.gmra.mxu0 %v703
        %v1031 = vpop.f32.mrf.mxu0
        %v1032 = vadd.f32 %v967, %v1031
        %1033 = vdwg.mxu0
        %v1034 = vmax.f32 %v857, 0.0
        %v1035 = vmax.f32 %v987, 0.0
        %v1036 = vmax.f32 %v860, 0.0
        %v1037 = vmax.f32 %v990, 0.0
        %v1038 = vmax.f32 %v863, 0.0
        %v1039 = vmax.f32 %v993, 0.0
        %v1040 = vmax.f32 %v866, 0.0
        %v1041 = vmax.f32 %v996, 0.0
        %v1042 = vmax.f32 %v869, 0.0
        %v1043 = vmax.f32 %v999, 0.0
        %v1044 = vmax.f32 %v872, 0.0
        %v1045 = vmax.f32 %v1002, 0.0
        %v1046 = vmax.f32 %v875, 0.0
        %v1047 = vmax.f32 %v1005, 0.0
        %v1048 = vmax.f32 %v878, 0.0
        %v1049 = vmax.f32 %v1008, 0.0
        %v1050 = vmax.f32 %v881, 0.0
        %v1051 = vmax.f32 %v1011, 0.0
        %v1052 = vmax.f32 %v884, 0.0
        %v1053 = vmax.f32 %v1014, 0.0
        %v1054 = vmax.f32 %v887, 0.0
        %v1055 = vmax.f32 %v1017, 0.0
        %v1056 = vmax.f32 %v890, 0.0
        %v1057 = vmax.f32 %v1020, 0.0
        %v1058 = vmax.f32 %v893, 0.0
        %v1059 = vmax.f32 %v1023, 0.0
        %v1060 = vmax.f32 %v896, 0.0
        %v1061 = vmax.f32 %v1026, 0.0
        %v1062 = vmax.f32 %v899, 0.0
        %v1063 = vmax.f32 %v1029, 0.0
        %v1064 = vmax.f32 %v902, 0.0
        %v1065 = vmax.f32 %v1032, 0.0
        %s1066 = sld [smem:[#allocation2]]
        %v1067 = vld [vmem:[#allocation9] sm:$0xff]
        %v1068 = vld [vmem:[#allocation9 + $0x8] sm:$0xff]
        %v1069 = vld [vmem:[#allocation9 + $0x10] sm:$0xff]
        %v1070 = vld [vmem:[#allocation9 + $0x18] sm:$0xff]
        %v1071 = vld [vmem:[#allocation9 + $0x20] sm:$0xff]
        %v1072 = vld [vmem:[#allocation9 + $0x28] sm:$0xff]
        %v1073 = vld [vmem:[#allocation9 + $0x30] sm:$0xff]
        %v1074 = vld [vmem:[#allocation9 + $0x38] sm:$0xff]
        %v1075 = vld [vmem:[#allocation9 + $0x40] sm:$0xff]
        %v1076 = vld [vmem:[#allocation9 + $0x48] sm:$0xff]
        %v1077 = vld [vmem:[#allocation9 + $0x50] sm:$0xff]
        %v1078 = vld [vmem:[#allocation9 + $0x58] sm:$0xff]
        %v1079 = vld [vmem:[#allocation9 + $0x60] sm:$0xff]
        %v1080 = vld [vmem:[#allocation9 + $0x68] sm:$0xff]
        %v1081 = vld [vmem:[#allocation9 + $0x70] sm:$0xff]
        %v1082 = vld [vmem:[#allocation9 + $0x78] sm:$0xff]
        %v1083 = vld [vmem:[#allocation9 + $0x80] sm:$0xff]
        %v1084 = vld [vmem:[#allocation9 + $0x88] sm:$0xff]
        %v1085 = vld [vmem:[#allocation9 + $0x90] sm:$0xff]
        %v1086 = vld [vmem:[#allocation9 + $0x98] sm:$0xff]
        %v1087 = vld [vmem:[#allocation9 + $0xa0] sm:$0xff]
        %v1088 = vld [vmem:[#allocation9 + $0xa8] sm:$0xff]
        %v1089 = vld [vmem:[#allocation9 + $0xb0] sm:$0xff]
        %v1090 = vld [vmem:[#allocation9 + $0xb8] sm:$0xff]
        %v1091 = vld [vmem:[#allocation9 + $0xc0] sm:$0xff]
        %v1092 = vld [vmem:[#allocation9 + $0xc8] sm:$0xff]
        %v1093 = vld [vmem:[#allocation9 + $0xd0] sm:$0xff]
        %v1094 = vld [vmem:[#allocation9 + $0xd8] sm:$0xff]
        %v1095 = vld [vmem:[#allocation9 + $0xe0] sm:$0xff]
        %v1096 = vld [vmem:[#allocation9 + $0xe8] sm:$0xff]
        %v1097 = vld [vmem:[#allocation9 + $0xf0] sm:$0xff]
        %v1098 = vld [vmem:[#allocation9 + $0xf8] sm:$0xff]
        %v1099 = vld [vmem:[%s7] sm:$0x1]
        %v1101 = vperm.slane %v1099, 0
        %1103 = vmatpush.msra.mxu0 %v1082
        %1104 = vmatpush.msra.mxu0 %v1081
        %1105 = vmatpush.msra.mxu0 %v1080
        %1106 = vmatpush.msra.mxu0 %v1079
        %1107 = vmatpush.msra.mxu0 %v1078
        %1108 = vmatpush.msra.mxu0 %v1077
        %1109 = vmatpush.msra.mxu0 %v1076
        %1110 = vmatpush.msra.mxu0 %v1075
        %1111 = vmatpush.msra.mxu0 %v1074
        %1112 = vmatpush.msra.mxu0 %v1073
        %1113 = vmatpush.msra.mxu0 %v1072
        %1114 = vmatpush.msra.mxu0 %v1071
        %1115 = vmatpush.msra.mxu0 %v1070
        %1116 = vmatpush.msra.mxu0 %v1069
        %1117 = vmatpush.msra.mxu0 %v1068
        %1118 = vmatpush.msra.mxu0 %v1067
        %1119 = vmatmul.f32.gmra.mxu0 %v1034
        %v1120 = vpop.f32.mrf.mxu0
        %v1121 = vadd.f32 %v1101, %v1120
        %1122 = vmatmul.f32.gmra.mxu0 %v1036
        %v1123 = vpop.f32.mrf.mxu0
        %v1124 = vadd.f32 %v1101, %v1123
        %1125 = vmatmul.f32.gmra.mxu0 %v1038
        %v1126 = vpop.f32.mrf.mxu0
        %v1127 = vadd.f32 %v1101, %v1126
        %1128 = vmatmul.f32.gmra.mxu0 %v1040
        %v1129 = vpop.f32.mrf.mxu0
        %v1130 = vadd.f32 %v1101, %v1129
        %1131 = vmatmul.f32.gmra.mxu0 %v1042
        %v1132 = vpop.f32.mrf.mxu0
        %v1133 = vadd.f32 %v1101, %v1132
        %1134 = vmatmul.f32.gmra.mxu0 %v1044
        %v1135 = vpop.f32.mrf.mxu0
        %v1136 = vadd.f32 %v1101, %v1135
        %1137 = vmatmul.f32.gmra.mxu0 %v1046
        %v1138 = vpop.f32.mrf.mxu0
        %v1139 = vadd.f32 %v1101, %v1138
        %1140 = vmatmul.f32.gmra.mxu0 %v1048
        %v1141 = vpop.f32.mrf.mxu0
        %v1142 = vadd.f32 %v1101, %v1141
        %1143 = vmatmul.f32.gmra.mxu0 %v1050
        %v1144 = vpop.f32.mrf.mxu0
        %v1145 = vadd.f32 %v1101, %v1144
        %1146 = vmatmul.f32.gmra.mxu0 %v1052
        %v1147 = vpop.f32.mrf.mxu0
        %v1148 = vadd.f32 %v1101, %v1147
        %1149 = vmatmul.f32.gmra.mxu0 %v1054
        %v1150 = vpop.f32.mrf.mxu0
        %v1151 = vadd.f32 %v1101, %v1150
        %1152 = vmatmul.f32.gmra.mxu0 %v1056
        %v1153 = vpop.f32.mrf.mxu0
        %v1154 = vadd.f32 %v1101, %v1153
        %1155 = vmatmul.f32.gmra.mxu0 %v1058
        %v1156 = vpop.f32.mrf.mxu0
        %v1157 = vadd.f32 %v1101, %v1156
        %1158 = vmatmul.f32.gmra.mxu0 %v1060
        %v1159 = vpop.f32.mrf.mxu0
        %v1160 = vadd.f32 %v1101, %v1159
        %1161 = vmatmul.f32.gmra.mxu0 %v1062
        %v1162 = vpop.f32.mrf.mxu0
        %v1163 = vadd.f32 %v1101, %v1162
        %1164 = vmatmul.f32.gmra.mxu0 %v1064
        %v1165 = vpop.f32.mrf.mxu0
        %v1166 = vadd.f32 %v1101, %v1165
        %1167 = vdwg.mxu0
        %1168 = vmatpush.msra.mxu0 %v1098
        %1169 = vmatpush.msra.mxu0 %v1097
        %1170 = vmatpush.msra.mxu0 %v1096
        %1171 = vmatpush.msra.mxu0 %v1095
        %1172 = vmatpush.msra.mxu0 %v1094
        %1173 = vmatpush.msra.mxu0 %v1093
        %1174 = vmatpush.msra.mxu0 %v1092
        %1175 = vmatpush.msra.mxu0 %v1091
        %1176 = vmatpush.msra.mxu0 %v1090
        %1177 = vmatpush.msra.mxu0 %v1089
        %1178 = vmatpush.msra.mxu0 %v1088
        %1179 = vmatpush.msra.mxu0 %v1087
        %1180 = vmatpush.msra.mxu0 %v1086
        %1181 = vmatpush.msra.mxu0 %v1085
        %1182 = vmatpush.msra.mxu0 %v1084
        %1183 = vmatpush.msra.mxu0 %v1083
        %1184 = vmatmul.f32.gmra.mxu0 %v1035
        %v1185 = vpop.f32.mrf.mxu0
        %v1186 = vadd.f32 %v1121, %v1185
        %1187 = vmatmul.f32.gmra.mxu0 %v1037
        %v1188 = vpop.f32.mrf.mxu0
        %v1189 = vadd.f32 %v1124, %v1188
        %1190 = vmatmul.f32.gmra.mxu0 %v1039
        %v1191 = vpop.f32.mrf.mxu0
        %v1192 = vadd.f32 %v1127, %v1191
        %1193 = vmatmul.f32.gmra.mxu0 %v1041
        %v1194 = vpop.f32.mrf.mxu0
        %v1195 = vadd.f32 %v1130, %v1194
        %1196 = vmatmul.f32.gmra.mxu0 %v1043
        %v1197 = vpop.f32.mrf.mxu0
        %v1198 = vadd.f32 %v1133, %v1197
        %1199 = vmatmul.f32.gmra.mxu0 %v1045
        %v1200 = vpop.f32.mrf.mxu0
        %v1201 = vadd.f32 %v1136, %v1200
        %1202 = vmatmul.f32.gmra.mxu0 %v1047
        %v1203 = vpop.f32.mrf.mxu0
        %v1204 = vadd.f32 %v1139, %v1203
        %1205 = vmatmul.f32.gmra.mxu0 %v1049
        %v1206 = vpop.f32.mrf.mxu0
        %v1207 = vadd.f32 %v1142, %v1206
        %1208 = vmatmul.f32.gmra.mxu0 %v1051
        %v1209 = vpop.f32.mrf.mxu0
        %v1210 = vadd.f32 %v1145, %v1209
        %1211 = vmatmul.f32.gmra.mxu0 %v1053
        %v1212 = vpop.f32.mrf.mxu0
        %v1213 = vadd.f32 %v1148, %v1212
        %1214 = vmatmul.f32.gmra.mxu0 %v1055
        %v1215 = vpop.f32.mrf.mxu0
        %v1216 = vadd.f32 %v1151, %v1215
        %1217 = vmatmul.f32.gmra.mxu0 %v1057
        %v1218 = vpop.f32.mrf.mxu0
        %v1219 = vadd.f32 %v1154, %v1218
        %1220 = vmatmul.f32.gmra.mxu0 %v1059
        %v1221 = vpop.f32.mrf.mxu0
        %v1222 = vadd.f32 %v1157, %v1221
        %1223 = vmatmul.f32.gmra.mxu0 %v1061
        %v1224 = vpop.f32.mrf.mxu0
        %v1225 = vadd.f32 %v1160, %v1224
        %1226 = vmatmul.f32.gmra.mxu0 %v1063
        %v1227 = vpop.f32.mrf.mxu0
        %v1228 = vadd.f32 %v1163, %v1227
        %1229 = vmatmul.f32.gmra.mxu0 %v1065
        %v1230 = vpop.f32.mrf.mxu0
        %v1231 = vadd.f32 %v1166, %v1230
        %1232 = vdwg.mxu0
        %v1233 = vstv %s1066
        %v1234 = vmul.f32 %v1186, %v1233
        %v1235 = vmul.f32 %v1189, %v1233
        %v1236 = vmul.f32 %v1192, %v1233
        %v1237 = vmul.f32 %v1195, %v1233
        %v1238 = vmul.f32 %v1198, %v1233
        %v1239 = vmul.f32 %v1201, %v1233
        %v1240 = vmul.f32 %v1204, %v1233
        %v1241 = vmul.f32 %v1207, %v1233
        %v1242 = vmul.f32 %v1210, %v1233
        %v1243 = vmul.f32 %v1213, %v1233
        %v1244 = vmul.f32 %v1216, %v1233
        %v1245 = vmul.f32 %v1219, %v1233
        %v1246 = vmul.f32 %v1222, %v1233
        %v1247 = vmul.f32 %v1225, %v1233
        %v1248 = vmul.f32 %v1228, %v1233
        %v1249 = vmul.f32 %v1231, %v1233
        %v1250 = vsub.f32 0.0, %v1234
        %v1251 = vsub.f32 0.0, %v1235
        %v1252 = vsub.f32 0.0, %v1236
        %v1253 = vsub.f32 0.0, %v1237
        %v1254 = vsub.f32 0.0, %v1238
        %v1255 = vsub.f32 0.0, %v1239
        %v1256 = vsub.f32 0.0, %v1240
        %v1257 = vsub.f32 0.0, %v1241
        %v1258 = vsub.f32 0.0, %v1242
        %v1259 = vsub.f32 0.0, %v1243
        %v1260 = vsub.f32 0.0, %v1244
        %v1261 = vsub.f32 0.0, %v1245
        %v1262 = vsub.f32 0.0, %v1246
        %v1263 = vsub.f32 0.0, %v1247
        %v1264 = vsub.f32 0.0, %v1248
        %v1265 = vsub.f32 0.0, %v1249
        %v1266 = vmul.f32 %v1250, 1.442695
        %v1267 = vpow.pop %v1266
        %v1268 = vmul.f32 %v1251, 1.442695
        %v1269 = vpow.pop %v1268
        %v1270 = vmul.f32 %v1252, 1.442695
        %v1271 = vpow.pop %v1270
        %v1272 = vmul.f32 %v1253, 1.442695
        %v1273 = vpow.pop %v1272
        %v1274 = vmul.f32 %v1254, 1.442695
        %v1275 = vpow.pop %v1274
        %v1276 = vmul.f32 %v1255, 1.442695
        %v1277 = vpow.pop %v1276
        %v1278 = vmul.f32 %v1256, 1.442695
        %v1279 = vpow.pop %v1278
        %v1280 = vmul.f32 %v1257, 1.442695
        %v1281 = vpow.pop %v1280
        %v1282 = vmul.f32 %v1258, 1.442695
        %v1283 = vpow.pop %v1282
        %v1284 = vmul.f32 %v1259, 1.442695
        %v1285 = vpow.pop %v1284
        %v1286 = vmul.f32 %v1260, 1.442695
        %v1287 = vpow.pop %v1286
        %v1288 = vmul.f32 %v1261, 1.442695
        %v1289 = vpow.pop %v1288
        %v1290 = vmul.f32 %v1262, 1.442695
        %v1291 = vpow.pop %v1290
        %v1292 = vmul.f32 %v1263, 1.442695
        %v1293 = vpow.pop %v1292
        %v1294 = vmul.f32 %v1264, 1.442695
        %v1295 = vpow.pop %v1294
        %v1296 = vmul.f32 %v1265, 1.442695
        %v1297 = vpow.pop %v1296
        %v1298 = vadd.f32 %v1267, 1.0
        %v1299 = vadd.f32 %v1269, 1.0
        %v1300 = vadd.f32 %v1271, 1.0
        %v1301 = vadd.f32 %v1273, 1.0
        %v1302 = vadd.f32 %v1275, 1.0
        %v1303 = vadd.f32 %v1277, 1.0
        %v1304 = vadd.f32 %v1279, 1.0
        %v1305 = vadd.f32 %v1281, 1.0
        %v1306 = vadd.f32 %v1283, 1.0
        %v1307 = vadd.f32 %v1285, 1.0
        %v1308 = vadd.f32 %v1287, 1.0
        %v1309 = vadd.f32 %v1289, 1.0
        %v1310 = vadd.f32 %v1291, 1.0
        %v1311 = vadd.f32 %v1293, 1.0
        %v1312 = vadd.f32 %v1295, 1.0
        %v1313 = vadd.f32 %v1297, 1.0
        %v1314 = vrcp.pop %v1298
        %v1315 = vmul.f32 %v1298, %v1314
        %v1316 = vsub.f32 1.0, %v1315
        %v1317 = vmul.f32 %v1314, %v1316
        %v1318 = vadd.f32 %v1314, %v1317
        %vm1319 = vweird.f32 %v1298
        %vm1320 = vweird.f32 %v1314
        %vm1321 = vmor %vm1319, %vm1320
        %v1322 = vsel %vm1321, %v1314, %v1318
        %v1323 = vand.u32 2147483647, %v1298
        %vm1324 = vcmp.eq.f32.partialorder %v1323, 8.507059e+37
        %v1325 = vand.u32 %v1298, 2147483648
        %v1326 = vor.u32 1.1754944e-38, %v1325
        %v1327 = vsel %vm1324, %v1326, %v1322
        %v1328 = vmul.f32 1.0, %v1327
        %v1329 = vrcp.pop %v1299
        %v1330 = vmul.f32 %v1299, %v1329
        %v1331 = vsub.f32 1.0, %v1330
        %v1332 = vmul.f32 %v1329, %v1331
        %v1333 = vadd.f32 %v1329, %v1332
        %vm1334 = vweird.f32 %v1299
        %vm1335 = vweird.f32 %v1329
        %vm1336 = vmor %vm1334, %vm1335
        %v1337 = vsel %vm1336, %v1329, %v1333
        %v1338 = vand.u32 2147483647, %v1299
        %vm1339 = vcmp.eq.f32.partialorder %v1338, 8.507059e+37
        %v1340 = vand.u32 %v1299, 2147483648
        %v1341 = vor.u32 1.1754944e-38, %v1340
        %v1342 = vsel %vm1339, %v1341, %v1337
        %v1343 = vmul.f32 1.0, %v1342
        %v1344 = vrcp.pop %v1300
        %v1345 = vmul.f32 %v1300, %v1344
        %v1346 = vsub.f32 1.0, %v1345
        %v1347 = vmul.f32 %v1344, %v1346
        %v1348 = vadd.f32 %v1344, %v1347
        %vm1349 = vweird.f32 %v1300
        %vm1350 = vweird.f32 %v1344
        %vm1351 = vmor %vm1349, %vm1350
        %v1352 = vsel %vm1351, %v1344, %v1348
        %v1353 = vand.u32 2147483647, %v1300
        %vm1354 = vcmp.eq.f32.partialorder %v1353, 8.507059e+37
        %v1355 = vand.u32 %v1300, 2147483648
        %v1356 = vor.u32 1.1754944e-38, %v1355
        %v1357 = vsel %vm1354, %v1356, %v1352
        %v1358 = vmul.f32 1.0, %v1357
        %v1359 = vrcp.pop %v1301
        %v1360 = vmul.f32 %v1301, %v1359
        %v1361 = vsub.f32 1.0, %v1360
        %v1362 = vmul.f32 %v1359, %v1361
        %v1363 = vadd.f32 %v1359, %v1362
        %vm1364 = vweird.f32 %v1301
        %vm1365 = vweird.f32 %v1359
        %vm1366 = vmor %vm1364, %vm1365
        %v1367 = vsel %vm1366, %v1359, %v1363
        %v1368 = vand.u32 2147483647, %v1301
        %vm1369 = vcmp.eq.f32.partialorder %v1368, 8.507059e+37
        %v1370 = vand.u32 %v1301, 2147483648
        %v1371 = vor.u32 1.1754944e-38, %v1370
        %v1372 = vsel %vm1369, %v1371, %v1367
        %v1373 = vmul.f32 1.0, %v1372
        %v1374 = vrcp.pop %v1302
        %v1375 = vmul.f32 %v1302, %v1374
        %v1376 = vsub.f32 1.0, %v1375
        %v1377 = vmul.f32 %v1374, %v1376
        %v1378 = vadd.f32 %v1374, %v1377
        %vm1379 = vweird.f32 %v1302
        %vm1380 = vweird.f32 %v1374
        %vm1381 = vmor %vm1379, %vm1380
        %v1382 = vsel %vm1381, %v1374, %v1378
        %v1383 = vand.u32 2147483647, %v1302
        %vm1384 = vcmp.eq.f32.partialorder %v1383, 8.507059e+37
        %v1385 = vand.u32 %v1302, 2147483648
        %v1386 = vor.u32 1.1754944e-38, %v1385
        %v1387 = vsel %vm1384, %v1386, %v1382
        %v1388 = vmul.f32 1.0, %v1387
        %v1389 = vrcp.pop %v1303
        %v1390 = vmul.f32 %v1303, %v1389
        %v1391 = vsub.f32 1.0, %v1390
        %v1392 = vmul.f32 %v1389, %v1391
        %v1393 = vadd.f32 %v1389, %v1392
        %vm1394 = vweird.f32 %v1303
        %vm1395 = vweird.f32 %v1389
        %vm1396 = vmor %vm1394, %vm1395
        %v1397 = vsel %vm1396, %v1389, %v1393
        %v1398 = vand.u32 2147483647, %v1303
        %vm1399 = vcmp.eq.f32.partialorder %v1398, 8.507059e+37
        %v1400 = vand.u32 %v1303, 2147483648
        %v1401 = vor.u32 1.1754944e-38, %v1400
        %v1402 = vsel %vm1399, %v1401, %v1397
        %v1403 = vmul.f32 1.0, %v1402
        %v1404 = vrcp.pop %v1304
        %v1405 = vmul.f32 %v1304, %v1404
        %v1406 = vsub.f32 1.0, %v1405
        %v1407 = vmul.f32 %v1404, %v1406
        %v1408 = vadd.f32 %v1404, %v1407
        %vm1409 = vweird.f32 %v1304
        %vm1410 = vweird.f32 %v1404
        %vm1411 = vmor %vm1409, %vm1410
        %v1412 = vsel %vm1411, %v1404, %v1408
        %v1413 = vand.u32 2147483647, %v1304
        %vm1414 = vcmp.eq.f32.partialorder %v1413, 8.507059e+37
        %v1415 = vand.u32 %v1304, 2147483648
        %v1416 = vor.u32 1.1754944e-38, %v1415
        %v1417 = vsel %vm1414, %v1416, %v1412
        %v1418 = vmul.f32 1.0, %v1417
        %v1419 = vrcp.pop %v1305
        %v1420 = vmul.f32 %v1305, %v1419
        %v1421 = vsub.f32 1.0, %v1420
        %v1422 = vmul.f32 %v1419, %v1421
        %v1423 = vadd.f32 %v1419, %v1422
        %vm1424 = vweird.f32 %v1305
        %vm1425 = vweird.f32 %v1419
        %vm1426 = vmor %vm1424, %vm1425
        %v1427 = vsel %vm1426, %v1419, %v1423
        %v1428 = vand.u32 2147483647, %v1305
        %vm1429 = vcmp.eq.f32.partialorder %v1428, 8.507059e+37
        %v1430 = vand.u32 %v1305, 2147483648
        %v1431 = vor.u32 1.1754944e-38, %v1430
        %v1432 = vsel %vm1429, %v1431, %v1427
        %v1433 = vmul.f32 1.0, %v1432
        %v1434 = vrcp.pop %v1306
        %v1435 = vmul.f32 %v1306, %v1434
        %v1436 = vsub.f32 1.0, %v1435
        %v1437 = vmul.f32 %v1434, %v1436
        %v1438 = vadd.f32 %v1434, %v1437
        %vm1439 = vweird.f32 %v1306
        %vm1440 = vweird.f32 %v1434
        %vm1441 = vmor %vm1439, %vm1440
        %v1442 = vsel %vm1441, %v1434, %v1438
        %v1443 = vand.u32 2147483647, %v1306
        %vm1444 = vcmp.eq.f32.partialorder %v1443, 8.507059e+37
        %v1445 = vand.u32 %v1306, 2147483648
        %v1446 = vor.u32 1.1754944e-38, %v1445
        %v1447 = vsel %vm1444, %v1446, %v1442
        %v1448 = vmul.f32 1.0, %v1447
        %v1449 = vrcp.pop %v1307
        %v1450 = vmul.f32 %v1307, %v1449
        %v1451 = vsub.f32 1.0, %v1450
        %v1452 = vmul.f32 %v1449, %v1451
        %v1453 = vadd.f32 %v1449, %v1452
        %vm1454 = vweird.f32 %v1307
        %vm1455 = vweird.f32 %v1449
        %vm1456 = vmor %vm1454, %vm1455
        %v1457 = vsel %vm1456, %v1449, %v1453
        %v1458 = vand.u32 2147483647, %v1307
        %vm1459 = vcmp.eq.f32.partialorder %v1458, 8.507059e+37
        %v1460 = vand.u32 %v1307, 2147483648
        %v1461 = vor.u32 1.1754944e-38, %v1460
        %v1462 = vsel %vm1459, %v1461, %v1457
        %v1463 = vmul.f32 1.0, %v1462
        %v1464 = vrcp.pop %v1308
        %v1465 = vmul.f32 %v1308, %v1464
        %v1466 = vsub.f32 1.0, %v1465
        %v1467 = vmul.f32 %v1464, %v1466
        %v1468 = vadd.f32 %v1464, %v1467
        %vm1469 = vweird.f32 %v1308
        %vm1470 = vweird.f32 %v1464
        %vm1471 = vmor %vm1469, %vm1470
        %v1472 = vsel %vm1471, %v1464, %v1468
        %v1473 = vand.u32 2147483647, %v1308
        %vm1474 = vcmp.eq.f32.partialorder %v1473, 8.507059e+37
        %v1475 = vand.u32 %v1308, 2147483648
        %v1476 = vor.u32 1.1754944e-38, %v1475
        %v1477 = vsel %vm1474, %v1476, %v1472
        %v1478 = vmul.f32 1.0, %v1477
        %v1479 = vrcp.pop %v1309
        %v1480 = vmul.f32 %v1309, %v1479
        %v1481 = vsub.f32 1.0, %v1480
        %v1482 = vmul.f32 %v1479, %v1481
        %v1483 = vadd.f32 %v1479, %v1482
        %vm1484 = vweird.f32 %v1309
        %vm1485 = vweird.f32 %v1479
        %vm1486 = vmor %vm1484, %vm1485
        %v1487 = vsel %vm1486, %v1479, %v1483
        %v1488 = vand.u32 2147483647, %v1309
        %vm1489 = vcmp.eq.f32.partialorder %v1488, 8.507059e+37
        %v1490 = vand.u32 %v1309, 2147483648
        %v1491 = vor.u32 1.1754944e-38, %v1490
        %v1492 = vsel %vm1489, %v1491, %v1487
        %v1493 = vmul.f32 1.0, %v1492
        %v1494 = vrcp.pop %v1310
        %v1495 = vmul.f32 %v1310, %v1494
        %v1496 = vsub.f32 1.0, %v1495
        %v1497 = vmul.f32 %v1494, %v1496
        %v1498 = vadd.f32 %v1494, %v1497
        %vm1499 = vweird.f32 %v1310
        %vm1500 = vweird.f32 %v1494
        %vm1501 = vmor %vm1499, %vm1500
        %v1502 = vsel %vm1501, %v1494, %v1498
        %v1503 = vand.u32 2147483647, %v1310
        %vm1504 = vcmp.eq.f32.partialorder %v1503, 8.507059e+37
        %v1505 = vand.u32 %v1310, 2147483648
        %v1506 = vor.u32 1.1754944e-38, %v1505
        %v1507 = vsel %vm1504, %v1506, %v1502
        %v1508 = vmul.f32 1.0, %v1507
        %v1509 = vrcp.pop %v1311
        %v1510 = vmul.f32 %v1311, %v1509
        %v1511 = vsub.f32 1.0, %v1510
        %v1512 = vmul.f32 %v1509, %v1511
        %v1513 = vadd.f32 %v1509, %v1512
        %vm1514 = vweird.f32 %v1311
        %vm1515 = vweird.f32 %v1509
        %vm1516 = vmor %vm1514, %vm1515
        %v1517 = vsel %vm1516, %v1509, %v1513
        %v1518 = vand.u32 2147483647, %v1311
        %vm1519 = vcmp.eq.f32.partialorder %v1518, 8.507059e+37
        %v1520 = vand.u32 %v1311, 2147483648
        %v1521 = vor.u32 1.1754944e-38, %v1520
        %v1522 = vsel %vm1519, %v1521, %v1517
        %v1523 = vmul.f32 1.0, %v1522
        %v1524 = vrcp.pop %v1312
        %v1525 = vmul.f32 %v1312, %v1524
        %v1526 = vsub.f32 1.0, %v1525
        %v1527 = vmul.f32 %v1524, %v1526
        %v1528 = vadd.f32 %v1524, %v1527
        %vm1529 = vweird.f32 %v1312
        %vm1530 = vweird.f32 %v1524
        %vm1531 = vmor %vm1529, %vm1530
        %v1532 = vsel %vm1531, %v1524, %v1528
        %v1533 = vand.u32 2147483647, %v1312
        %vm1534 = vcmp.eq.f32.partialorder %v1533, 8.507059e+37
        %v1535 = vand.u32 %v1312, 2147483648
        %v1536 = vor.u32 1.1754944e-38, %v1535
        %v1537 = vsel %vm1534, %v1536, %v1532
        %v1538 = vmul.f32 1.0, %v1537
        %v1539 = vrcp.pop %v1313
        %v1540 = vmul.f32 %v1313, %v1539
        %v1541 = vsub.f32 1.0, %v1540
        %v1542 = vmul.f32 %v1539, %v1541
        %v1543 = vadd.f32 %v1539, %v1542
        %vm1544 = vweird.f32 %v1313
        %vm1545 = vweird.f32 %v1539
        %vm1546 = vmor %vm1544, %vm1545
        %v1547 = vsel %vm1546, %v1539, %v1543
        %v1548 = vand.u32 2147483647, %v1313
        %vm1549 = vcmp.eq.f32.partialorder %v1548, 8.507059e+37
        %v1550 = vand.u32 %v1313, 2147483648
        %v1551 = vor.u32 1.1754944e-38, %v1550
        %v1552 = vsel %vm1549, %v1551, %v1547
        %v1553 = vmul.f32 1.0, %v1552
        %1554 = vst [vmem:[%s477] sm:$0xff] %v1328
        %1555 = vst [vmem:[%s477 + $0x8] sm:$0xff] %v1343
        %1556 = vst [vmem:[%s477 + $0x10] sm:$0xff] %v1358
        %1557 = vst [vmem:[%s477 + $0x18] sm:$0xff] %v1373
        %1558 = vst [vmem:[%s477 + $0x20] sm:$0xff] %v1388
        %1559 = vst [vmem:[%s477 + $0x28] sm:$0xff] %v1403
        %1560 = vst [vmem:[%s477 + $0x30] sm:$0xff] %v1418
        %1561 = vst [vmem:[%s477 + $0x38] sm:$0xff] %v1433
        %1562 = vst [vmem:[%s477 + $0x40] sm:$0xff] %v1448
        %1563 = vst [vmem:[%s477 + $0x48] sm:$0xff] %v1463
        %1564 = vst [vmem:[%s477 + $0x50] sm:$0xff] %v1478
        %1565 = vst [vmem:[%s477 + $0x58] sm:$0xff] %v1493
        %1566 = vst [vmem:[%s477 + $0x60] sm:$0xff] %v1508
        %1567 = vst [vmem:[%s477 + $0x68] sm:$0xff] %v1523
        %1568 = vst [vmem:[%s477 + $0x70] sm:$0xff] %v1538
        %1569 = vst [vmem:[%s477 + $0x78] sm:$0xff] %v1553
        %v1570 = vld [vmem:[#allocation11] sm:$0xff]
        %v1571 = vld [vmem:[#allocation11 + $0x8] sm:$0xff]
        %v1572 = vld [vmem:[#allocation11 + $0x10] sm:$0xff]
        %v1573 = vld [vmem:[#allocation11 + $0x18] sm:$0xff]
        %v1574 = vld [vmem:[#allocation11 + $0x20] sm:$0xff]
        %v1575 = vld [vmem:[#allocation11 + $0x28] sm:$0xff]
        %v1576 = vld [vmem:[#allocation11 + $0x30] sm:$0xff]
        %v1577 = vld [vmem:[#allocation11 + $0x38] sm:$0xff]
        %v1578 = vld [vmem:[#allocation11 + $0x40] sm:$0xff]
        %v1579 = vld [vmem:[#allocation11 + $0x48] sm:$0xff]
        %v1580 = vld [vmem:[#allocation11 + $0x50] sm:$0xff]
        %v1581 = vld [vmem:[#allocation11 + $0x58] sm:$0xff]
        %v1582 = vld [vmem:[#allocation11 + $0x60] sm:$0xff]
        %v1583 = vld [vmem:[#allocation11 + $0x68] sm:$0xff]
        %v1584 = vld [vmem:[#allocation11 + $0x70] sm:$0xff]
        %v1585 = vld [vmem:[#allocation11 + $0x78] sm:$0xff]
        %v1586 = vld [vmem:[#allocation11 + $0x80] sm:$0xff]
        %v1587 = vld [vmem:[#allocation11 + $0x88] sm:$0xff]
        %v1588 = vld [vmem:[#allocation11 + $0x90] sm:$0xff]
        %v1589 = vld [vmem:[#allocation11 + $0x98] sm:$0xff]
        %v1590 = vld [vmem:[#allocation11 + $0xa0] sm:$0xff]
        %v1591 = vld [vmem:[#allocation11 + $0xa8] sm:$0xff]
        %v1592 = vld [vmem:[#allocation11 + $0xb0] sm:$0xff]
        %v1593 = vld [vmem:[#allocation11 + $0xb8] sm:$0xff]
        %v1594 = vld [vmem:[#allocation11 + $0xc0] sm:$0xff]
        %v1595 = vld [vmem:[#allocation11 + $0xc8] sm:$0xff]
        %v1596 = vld [vmem:[#allocation11 + $0xd0] sm:$0xff]
        %v1597 = vld [vmem:[#allocation11 + $0xd8] sm:$0xff]
        %v1598 = vld [vmem:[#allocation11 + $0xe0] sm:$0xff]
        %v1599 = vld [vmem:[#allocation11 + $0xe8] sm:$0xff]
        %v1600 = vld [vmem:[#allocation11 + $0xf0] sm:$0xff]
        %v1601 = vld [vmem:[#allocation11 + $0xf8] sm:$0xff]
        %v1602 = vld [vmem:[%s9] sm:$0x1]
        %v1604 = vperm.slane %v1602, 0
        %1606 = vmatpush.msra.mxu0 %v1585
        %1607 = vmatpush.msra.mxu0 %v1584
        %1608 = vmatpush.msra.mxu0 %v1583
        %1609 = vmatpush.msra.mxu0 %v1582
        %1610 = vmatpush.msra.mxu0 %v1581
        %1611 = vmatpush.msra.mxu0 %v1580
        %1612 = vmatpush.msra.mxu0 %v1579
        %1613 = vmatpush.msra.mxu0 %v1578
        %1614 = vmatpush.msra.mxu0 %v1577
        %1615 = vmatpush.msra.mxu0 %v1576
        %1616 = vmatpush.msra.mxu0 %v1575
        %1617 = vmatpush.msra.mxu0 %v1574
        %1618 = vmatpush.msra.mxu0 %v1573
        %1619 = vmatpush.msra.mxu0 %v1572
        %1620 = vmatpush.msra.mxu0 %v1571
        %1621 = vmatpush.msra.mxu0 %v1570
        %1622 = vmatmul.f32.gmra.mxu0 %v1034
        %v1623 = vpop.f32.mrf.mxu0
        %v1624 = vadd.f32 %v1604, %v1623
        %1625 = vmatmul.f32.gmra.mxu0 %v1036
        %v1626 = vpop.f32.mrf.mxu0
        %v1627 = vadd.f32 %v1604, %v1626
        %1628 = vmatmul.f32.gmra.mxu0 %v1038
        %v1629 = vpop.f32.mrf.mxu0
        %v1630 = vadd.f32 %v1604, %v1629
        %1631 = vmatmul.f32.gmra.mxu0 %v1040
        %v1632 = vpop.f32.mrf.mxu0
        %v1633 = vadd.f32 %v1604, %v1632
        %1634 = vmatmul.f32.gmra.mxu0 %v1042
        %v1635 = vpop.f32.mrf.mxu0
        %v1636 = vadd.f32 %v1604, %v1635
        %1637 = vmatmul.f32.gmra.mxu0 %v1044
        %v1638 = vpop.f32.mrf.mxu0
        %v1639 = vadd.f32 %v1604, %v1638
        %1640 = vmatmul.f32.gmra.mxu0 %v1046
        %v1641 = vpop.f32.mrf.mxu0
        %v1642 = vadd.f32 %v1604, %v1641
        %1643 = vmatmul.f32.gmra.mxu0 %v1048
        %v1644 = vpop.f32.mrf.mxu0
        %v1645 = vadd.f32 %v1604, %v1644
        %1646 = vmatmul.f32.gmra.mxu0 %v1050
        %v1647 = vpop.f32.mrf.mxu0
        %v1648 = vadd.f32 %v1604, %v1647
        %1649 = vmatmul.f32.gmra.mxu0 %v1052
        %v1650 = vpop.f32.mrf.mxu0
        %v1651 = vadd.f32 %v1604, %v1650
        %1652 = vmatmul.f32.gmra.mxu0 %v1054
        %v1653 = vpop.f32.mrf.mxu0
        %v1654 = vadd.f32 %v1604, %v1653
        %1655 = vmatmul.f32.gmra.mxu0 %v1056
        %v1656 = vpop.f32.mrf.mxu0
        %v1657 = vadd.f32 %v1604, %v1656
        %1658 = vmatmul.f32.gmra.mxu0 %v1058
        %v1659 = vpop.f32.mrf.mxu0
        %v1660 = vadd.f32 %v1604, %v1659
        %1661 = vmatmul.f32.gmra.mxu0 %v1060
        %v1662 = vpop.f32.mrf.mxu0
        %v1663 = vadd.f32 %v1604, %v1662
        %1664 = vmatmul.f32.gmra.mxu0 %v1062
        %v1665 = vpop.f32.mrf.mxu0
        %v1666 = vadd.f32 %v1604, %v1665
        %1667 = vmatmul.f32.gmra.mxu0 %v1064
        %v1668 = vpop.f32.mrf.mxu0
        %v1669 = vadd.f32 %v1604, %v1668
        %1670 = vdwg.mxu0
        %1671 = vmatpush.msra.mxu0 %v1601
        %1672 = vmatpush.msra.mxu0 %v1600
        %1673 = vmatpush.msra.mxu0 %v1599
        %1674 = vmatpush.msra.mxu0 %v1598
        %1675 = vmatpush.msra.mxu0 %v1597
        %1676 = vmatpush.msra.mxu0 %v1596
        %1677 = vmatpush.msra.mxu0 %v1595
        %1678 = vmatpush.msra.mxu0 %v1594
        %1679 = vmatpush.msra.mxu0 %v1593
        %1680 = vmatpush.msra.mxu0 %v1592
        %1681 = vmatpush.msra.mxu0 %v1591
        %1682 = vmatpush.msra.mxu0 %v1590
        %1683 = vmatpush.msra.mxu0 %v1589
        %1684 = vmatpush.msra.mxu0 %v1588
        %1685 = vmatpush.msra.mxu0 %v1587
        %1686 = vmatpush.msra.mxu0 %v1586
        %1687 = vmatmul.f32.gmra.mxu0 %v1035
        %v1688 = vpop.f32.mrf.mxu0
        %v1689 = vadd.f32 %v1624, %v1688
        %1690 = vmatmul.f32.gmra.mxu0 %v1037
        %v1691 = vpop.f32.mrf.mxu0
        %v1692 = vadd.f32 %v1627, %v1691
        %1693 = vmatmul.f32.gmra.mxu0 %v1039
        %v1694 = vpop.f32.mrf.mxu0
        %v1695 = vadd.f32 %v1630, %v1694
        %1696 = vmatmul.f32.gmra.mxu0 %v1041
        %v1697 = vpop.f32.mrf.mxu0
        %v1698 = vadd.f32 %v1633, %v1697
        %1699 = vmatmul.f32.gmra.mxu0 %v1043
        %v1700 = vpop.f32.mrf.mxu0
        %v1701 = vadd.f32 %v1636, %v1700
        %1702 = vmatmul.f32.gmra.mxu0 %v1045
        %v1703 = vpop.f32.mrf.mxu0
        %v1704 = vadd.f32 %v1639, %v1703
        %1705 = vmatmul.f32.gmra.mxu0 %v1047
        %v1706 = vpop.f32.mrf.mxu0
        %v1707 = vadd.f32 %v1642, %v1706
        %1708 = vmatmul.f32.gmra.mxu0 %v1049
        %v1709 = vpop.f32.mrf.mxu0
        %v1710 = vadd.f32 %v1645, %v1709
        %1711 = vmatmul.f32.gmra.mxu0 %v1051
        %v1712 = vpop.f32.mrf.mxu0
        %v1713 = vadd.f32 %v1648, %v1712
        %1714 = vmatmul.f32.gmra.mxu0 %v1053
        %v1715 = vpop.f32.mrf.mxu0
        %v1716 = vadd.f32 %v1651, %v1715
        %1717 = vmatmul.f32.gmra.mxu0 %v1055
        %v1718 = vpop.f32.mrf.mxu0
        %v1719 = vadd.f32 %v1654, %v1718
        %1720 = vmatmul.f32.gmra.mxu0 %v1057
        %v1721 = vpop.f32.mrf.mxu0
        %v1722 = vadd.f32 %v1657, %v1721
        %1723 = vmatmul.f32.gmra.mxu0 %v1059
        %v1724 = vpop.f32.mrf.mxu0
        %v1725 = vadd.f32 %v1660, %v1724
        %1726 = vmatmul.f32.gmra.mxu0 %v1061
        %v1727 = vpop.f32.mrf.mxu0
        %v1728 = vadd.f32 %v1663, %v1727
        %1729 = vmatmul.f32.gmra.mxu0 %v1063
        %v1730 = vpop.f32.mrf.mxu0
        %v1731 = vadd.f32 %v1666, %v1730
        %1732 = vmatmul.f32.gmra.mxu0 %v1065
        %v1733 = vpop.f32.mrf.mxu0
        %v1734 = vadd.f32 %v1669, %v1733
        %1735 = vdwg.mxu0
        %v1736 = vmax.f32 %v1689, 0.0
        %v1737 = vmax.f32 %v1692, 0.0
        %v1738 = vmax.f32 %v1695, 0.0
        %v1739 = vmax.f32 %v1698, 0.0
        %v1740 = vmax.f32 %v1701, 0.0
        %v1741 = vmax.f32 %v1704, 0.0
        %v1742 = vmax.f32 %v1707, 0.0
        %v1743 = vmax.f32 %v1710, 0.0
        %v1744 = vmax.f32 %v1713, 0.0
        %v1745 = vmax.f32 %v1716, 0.0
        %v1746 = vmax.f32 %v1719, 0.0
        %v1747 = vmax.f32 %v1722, 0.0
        %v1748 = vmax.f32 %v1725, 0.0
        %v1749 = vmax.f32 %v1728, 0.0
        %v1750 = vmax.f32 %v1731, 0.0
        %v1751 = vmax.f32 %v1734, 0.0
        %v1752 = vand.u32 2147483647, %v1689
        %v1753 = vand.u32 2147483647, %v1692
        %v1754 = vand.u32 2147483647, %v1695
        %v1755 = vand.u32 2147483647, %v1698
        %v1756 = vand.u32 2147483647, %v1701
        %v1757 = vand.u32 2147483647, %v1704
        %v1758 = vand.u32 2147483647, %v1707
        %v1759 = vand.u32 2147483647, %v1710
        %v1760 = vand.u32 2147483647, %v1713
        %v1761 = vand.u32 2147483647, %v1716
        %v1762 = vand.u32 2147483647, %v1719
        %v1763 = vand.u32 2147483647, %v1722
        %v1764 = vand.u32 2147483647, %v1725
        %v1765 = vand.u32 2147483647, %v1728
        %v1766 = vand.u32 2147483647, %v1731
        %v1767 = vand.u32 2147483647, %v1734
        %v1768 = vsub.f32 0.0, %v1752
        %v1769 = vsub.f32 0.0, %v1753
        %v1770 = vsub.f32 0.0, %v1754
        %v1771 = vsub.f32 0.0, %v1755
        %v1772 = vsub.f32 0.0, %v1756
        %v1773 = vsub.f32 0.0, %v1757
        %v1774 = vsub.f32 0.0, %v1758
        %v1775 = vsub.f32 0.0, %v1759
        %v1776 = vsub.f32 0.0, %v1760
        %v1777 = vsub.f32 0.0, %v1761
        %v1778 = vsub.f32 0.0, %v1762
        %v1779 = vsub.f32 0.0, %v1763
        %v1780 = vsub.f32 0.0, %v1764
        %v1781 = vsub.f32 0.0, %v1765
        %v1782 = vsub.f32 0.0, %v1766
        %v1783 = vsub.f32 0.0, %v1767
        %v1784 = vmul.f32 %v1768, 1.442695
        %v1785 = vpow.pop %v1784
        %v1786 = vmul.f32 %v1769, 1.442695
        %v1787 = vpow.pop %v1786
        %v1788 = vmul.f32 %v1770, 1.442695
        %v1789 = vpow.pop %v1788
        %v1790 = vmul.f32 %v1771, 1.442695
        %v1791 = vpow.pop %v1790
        %v1792 = vmul.f32 %v1772, 1.442695
        %v1793 = vpow.pop %v1792
        %v1794 = vmul.f32 %v1773, 1.442695
        %v1795 = vpow.pop %v1794
        %v1796 = vmul.f32 %v1774, 1.442695
        %v1797 = vpow.pop %v1796
        %v1798 = vmul.f32 %v1775, 1.442695
        %v1799 = vpow.pop %v1798
        %v1800 = vmul.f32 %v1776, 1.442695
        %v1801 = vpow.pop %v1800
        %v1802 = vmul.f32 %v1777, 1.442695
        %v1803 = vpow.pop %v1802
        %v1804 = vmul.f32 %v1778, 1.442695
        %v1805 = vpow.pop %v1804
        %v1806 = vmul.f32 %v1779, 1.442695
        %v1807 = vpow.pop %v1806
        %v1808 = vmul.f32 %v1780, 1.442695
        %v1809 = vpow.pop %v1808
        %v1810 = vmul.f32 %v1781, 1.442695
        %v1811 = vpow.pop %v1810
        %v1812 = vmul.f32 %v1782, 1.442695
        %v1813 = vpow.pop %v1812
        %v1814 = vmul.f32 %v1783, 1.442695
        %v1815 = vpow.pop %v1814
        %v1816 = vadd.f32 %v1785, 1.0
        %v1817 = vadd.f32 %v1787, 1.0
        %v1818 = vadd.f32 %v1789, 1.0
        %v1819 = vadd.f32 %v1791, 1.0
        %v1820 = vadd.f32 %v1793, 1.0
        %v1821 = vadd.f32 %v1795, 1.0
        %v1822 = vadd.f32 %v1797, 1.0
        %v1823 = vadd.f32 %v1799, 1.0
        %v1824 = vadd.f32 %v1801, 1.0
        %v1825 = vadd.f32 %v1803, 1.0
        %v1826 = vadd.f32 %v1805, 1.0
        %v1827 = vadd.f32 %v1807, 1.0
        %v1828 = vadd.f32 %v1809, 1.0
        %v1829 = vadd.f32 %v1811, 1.0
        %v1830 = vadd.f32 %v1813, 1.0
        %v1831 = vadd.f32 %v1815, 1.0
        %v1832 = vlog2.pop %v1816
        %v1833 = vmul.f32 %v1832, 0.6931472
        %v1834 = vlog2.pop %v1817
        %v1835 = vmul.f32 %v1834, 0.6931472
        %v1836 = vlog2.pop %v1818
        %v1837 = vmul.f32 %v1836, 0.6931472
        %v1838 = vlog2.pop %v1819
        %v1839 = vmul.f32 %v1838, 0.6931472
        %v1840 = vlog2.pop %v1820
        %v1841 = vmul.f32 %v1840, 0.6931472
        %v1842 = vlog2.pop %v1821
        %v1843 = vmul.f32 %v1842, 0.6931472
        %v1844 = vlog2.pop %v1822
        %v1845 = vmul.f32 %v1844, 0.6931472
        %v1846 = vlog2.pop %v1823
        %v1847 = vmul.f32 %v1846, 0.6931472
        %v1848 = vlog2.pop %v1824
        %v1849 = vmul.f32 %v1848, 0.6931472
        %v1850 = vlog2.pop %v1825
        %v1851 = vmul.f32 %v1850, 0.6931472
        %v1852 = vlog2.pop %v1826
        %v1853 = vmul.f32 %v1852, 0.6931472
        %v1854 = vlog2.pop %v1827
        %v1855 = vmul.f32 %v1854, 0.6931472
        %v1856 = vlog2.pop %v1828
        %v1857 = vmul.f32 %v1856, 0.6931472
        %v1858 = vlog2.pop %v1829
        %v1859 = vmul.f32 %v1858, 0.6931472
        %v1860 = vlog2.pop %v1830
        %v1861 = vmul.f32 %v1860, 0.6931472
        %v1862 = vlog2.pop %v1831
        %v1863 = vmul.f32 %v1862, 0.6931472
        %v1864 = vadd.f32 %v1736, %v1833
        %v1865 = vadd.f32 %v1737, %v1835
        %v1866 = vadd.f32 %v1738, %v1837
        %v1867 = vadd.f32 %v1739, %v1839
        %v1868 = vadd.f32 %v1740, %v1841
        %v1869 = vadd.f32 %v1741, %v1843
        %v1870 = vadd.f32 %v1742, %v1845
        %v1871 = vadd.f32 %v1743, %v1847
        %v1872 = vadd.f32 %v1744, %v1849
        %v1873 = vadd.f32 %v1745, %v1851
        %v1874 = vadd.f32 %v1746, %v1853
        %v1875 = vadd.f32 %v1747, %v1855
        %v1876 = vadd.f32 %v1748, %v1857
        %v1877 = vadd.f32 %v1749, %v1859
        %v1878 = vadd.f32 %v1750, %v1861
        %v1879 = vadd.f32 %v1751, %v1863
        %1880 = vst [vmem:[%s484] sm:$0xff] %v1864
        %1881 = vst [vmem:[%s484 + $0x8] sm:$0xff] %v1865
        %1882 = vst [vmem:[%s484 + $0x10] sm:$0xff] %v1866
        %1883 = vst [vmem:[%s484 + $0x18] sm:$0xff] %v1867
        %1884 = vst [vmem:[%s484 + $0x20] sm:$0xff] %v1868
        %1885 = vst [vmem:[%s484 + $0x28] sm:$0xff] %v1869
        %1886 = vst [vmem:[%s484 + $0x30] sm:$0xff] %v1870
        %1887 = vst [vmem:[%s484 + $0x38] sm:$0xff] %v1871
        %1888 = vst [vmem:[%s484 + $0x40] sm:$0xff] %v1872
        %1889 = vst [vmem:[%s484 + $0x48] sm:$0xff] %v1873
        %1890 = vst [vmem:[%s484 + $0x50] sm:$0xff] %v1874
        %1891 = vst [vmem:[%s484 + $0x58] sm:$0xff] %v1875
        %1892 = vst [vmem:[%s484 + $0x60] sm:$0xff] %v1876
        %1893 = vst [vmem:[%s484 + $0x68] sm:$0xff] %v1877
        %1894 = vst [vmem:[%s484 + $0x70] sm:$0xff] %v1878
        %1895 = vst [vmem:[%s484 + $0x78] sm:$0xff] %v1879
        %s1896 = sand.u32 %s258, 1
        %s1897 = scalar_lea.sflag [#allocation5], %s1896
        %s1898 = sand.u32 %s258, 1
        %s1899 = smul.addr %s1898, 128
        %s1900 = scalar_lea.vmem [#allocation12], %s1899
        %s1901 = sand.u32 %s284, 1
        %s1902 = scalar_lea.sflag [#allocation14], %s1901
        %s1903 = sand.u32 %s284, 1
        %s1904 = smul.addr %s1903, 128
        %s1905 = scalar_lea.vmem [#allocation13], %s1904
        // Predicated region
        $region81: #{tpu_custom_call.1} parent=59 // pred_check
          %p1906 = pneg %p268
        $region82: #{tpu_custom_call.1} parent=59 // pred_check_branch
          %1908 = sbr.rel (%p1906) target = $region84
        $region83: #{tpu_custom_call.1} parent=59 // pred_region
          %s1909 = smul.u32 16, %s35
          %1911 = vsyncadd %s1897, 0
          %s1912 = smul.addr %s1909, 8
          %s1913 = scalar_lea.hbm %s10, %s1912
          %s1914 = sshll.u32 %s1900, 4
          %s1915 = int_to_ptr.vmem [resolvable:$true] %s1914
          %s1916 = sshll.u32 %s1913, 4
          %s1917 = int_to_ptr.hbm [resolvable:$true] %s1916
          %1922 = dma.vmem_to_hbm [thread:$0]  %s1915, 2048, %s1917, %s1897, 128, 128, 8
        $region84: #{tpu_custom_call.1} parent=59 // pred_fallthru
          _
        // Predicated region
        $region85: #{tpu_custom_call.1} parent=59 // pred_check
          %p1923 = pneg %p294
        $region86: #{tpu_custom_call.1} parent=59 // pred_check_branch
          %1925 = sbr.rel (%p1923) target = $region88
        $region87: #{tpu_custom_call.1} parent=59 // pred_region
          %s1926 = smul.u32 16, %s35
          %1928 = vsyncadd %s1902, 0
          %s1929 = smul.addr %s1926, 8
          %s1930 = scalar_lea.hbm %s11, %s1929
          %s1931 = sshll.u32 %s1905, 4
          %s1932 = int_to_ptr.vmem [resolvable:$true] %s1931
          %s1933 = sshll.u32 %s1930, 4
          %s1934 = int_to_ptr.hbm [resolvable:$true] %s1933
          %1939 = dma.vmem_to_hbm [thread:$0]  %s1932, 2048, %s1934, %s1902, 128, 128, 8
        $region88: #{tpu_custom_call.1} parent=59 // pred_fallthru
          _
      $region60: #{tpu_custom_call.1} parent=5 // pred_fallthru
        _
      %p1940 = scmp.le.s32.totalorder 2, %s30
      // Predicated region
      $region89: #{tpu_custom_call.1} parent=5 // pred_check
        %p1941 = pneg %p1940
      $region90: #{tpu_custom_call.1} parent=5 // pred_check_branch
        %1943 = sbr.rel (%p1941) target = $region92
      $region91: #{tpu_custom_call.1} parent=5 // pred_region
        %s1944 = ssub.s32 %s30, 2
        // Predicated region
        $region93: #{tpu_custom_call.1} parent=91 // pred_check
          %p1945 = pneg %p274
        $region94: #{tpu_custom_call.1} parent=91 // pred_check_branch
          %1947 = sbr.rel (%p1945) target = $region96
        $region95: #{tpu_custom_call.1} parent=91 // pred_region
          %s1948 = sand.u32 %s259, 1
          %s1949 = scalar_lea.sflag [#allocation5], %s1948
          %s1950 = sand.u32 %s259, 1
          %s1951 = smul.addr %s1950, 128
          %s1952 = scalar_lea.vmem [#allocation12], %s1951
          %1954 = dma.done %s1949, 2048
        $region96: #{tpu_custom_call.1} parent=91 // pred_fallthru
          _
        // Predicated region
        $region97: #{tpu_custom_call.1} parent=91 // pred_check
          %p1955 = pneg %p300
        $region98: #{tpu_custom_call.1} parent=91 // pred_check_branch
          %1957 = sbr.rel (%p1955) target = $region100
        $region99: #{tpu_custom_call.1} parent=91 // pred_region
          %s1958 = sand.u32 %s285, 1
          %s1959 = scalar_lea.sflag [#allocation14], %s1958
          %s1960 = sand.u32 %s285, 1
          %s1961 = smul.addr %s1960, 128
          %s1962 = scalar_lea.vmem [#allocation13], %s1961
          %1964 = dma.done %s1959, 2048
        $region100: #{tpu_custom_call.1} parent=91 // pred_fallthru
          _
      $region92: #{tpu_custom_call.1} parent=5 // pred_fallthru
        _
    $region6: #{tpu_custom_call.1} parent=1 // loop_footer
      %s34 = sadd.s32 1, %s30
    $region7: #{tpu_custom_call.1} parent=1 // loop_footer_branch
      %29 = sbr.rel target = $region3
    $region8: #{tpu_custom_call.1} parent=1 // loop_exit
      _
    %1965 = vsyncpa [#allocation4], 1
    %s1966 = scalar_lea.sflag [#allocation4], 1
    %1967 = vsyncpa %s1966, 1
    %1968 = vsyncpa [#allocation7], 1
    %1969 = vsyncpa [#allocation10], 1
    %1970 = vsyncpa [#allocation5], 1
    %s1971 = scalar_lea.sflag [#allocation5], 1
    %1972 = vsyncpa %s1971, 1
    %1973 = vsyncpa [#allocation14], 1
    %s1974 = scalar_lea.sflag [#allocation14], 1
    %1975 = vsyncpa %s1974, 1

</llo_original>
